<compile_context>
chip_gen: v5e
topology: v5e:2x2
jax: 0.10.0
libtpu: 0.0.40
codegen_flags: <defaults>
</compile_context>

<pallas_src>
import functools

import jax
import jax.numpy as jnp
from jax.experimental import pallas as pl
from jax.experimental.pallas import tpu as pltpu

C_PAD = 128  # lane-dense padded class dimension (real classes sliced out in wrapper)


def _round_up(x, m):
    return (x + m - 1) // m * m


def latent_classifier_kernel(z_ref, w1_ref, b1_ref, w2_ref, b2_ref,
                             w3_ref, b3_ref, o_ref):
    # fc1 + relu: bf16 operands on the MXU, f32 accumulation, f32 elementwise.
    h1 = jnp.dot(z_ref[...], w1_ref[...], preferred_element_type=jnp.float32)
    h1 = jnp.maximum(h1 + b1_ref[...], 0.0)
    # fc2 + relu
    h2 = jnp.dot(h1.astype(jnp.bfloat16), w2_ref[...],
                 preferred_element_type=jnp.float32)
    h2 = jnp.maximum(h2 + b2_ref[...], 0.0)
    # fc3 logits over the 128-lane padded class axis (padded lanes carry -1e30 bias,
    # zero weight columns), so exp() on padded lanes is exactly 0.
    logits = jnp.dot(h2.astype(jnp.bfloat16), w3_ref[...],
                     preferred_element_type=jnp.float32)
    logits = logits + b3_ref[...]
    # Numerically stable softmax over the padded lane axis.
    m = jnp.max(logits, axis=-1, keepdims=True)
    e = jnp.exp(logits - m)
    s = jnp.sum(e, axis=-1, keepdims=True)
    o_ref[...] = (e * pl.reciprocal(s, approx=True)).astype(o_ref.dtype)


def _choose_block_b(batch, requested):
    """Batch tile: multiple of 8, capped at the (rounded-up) batch, and split so the
    grid has >= 2 steps when possible (v7x shards 'parallel' axes across 2 TCs)."""
    bb = max(8, min(_round_up(requested, 8), _round_up(batch, 8)))
    if bb >= batch and batch > 8:
        bb = max(8, _round_up((batch + 1) // 2, 8))
    return bb


@functools.partial(jax.jit, static_argnames=("block_b",))
def latent_classifier(z, w1, b1, w2, b2, w3, b3, *, block_b=256):
    B, D = z.shape
    H1 = w1.shape[1]
    H2 = w2.shape[1]
    C = w3.shape[1]

    bb = _choose_block_b(B, block_b)
    B_pad = _round_up(B, bb)

    # One-time operand prep: bf16 matmul inputs, f32 biases, lane-dense fc3 padding.
    z_bf = z.astype(jnp.bfloat16)
    if B_pad != B:
        z_bf = jnp.pad(z_bf, ((0, B_pad - B), (0, 0)))  # padded rows discarded below
    w1_bf = w1.astype(jnp.bfloat16)
    w2_bf = w2.astype(jnp.bfloat16)
    w3_pad = jnp.zeros((H2, C_PAD), jnp.float32).at[:, :C].set(w3).astype(jnp.bfloat16)
    b1_f = b1.reshape(1, H1).astype(jnp.float32)
    b2_f = b2.reshape(1, H2).astype(jnp.float32)
    b3_pad = jnp.full((1, C_PAD), -1e30, jnp.float32).at[:, :C].set(b3.reshape(1, C))

    grid = (B_pad // bb,)

    # Advisory cost estimate for XLA's scheduler (per full call).
    flops = 2 * B_pad * (D * H1 + H1 * H2 + H2 * C_PAD)
    bytes_accessed = (
        z_bf.size * 2 + w1_bf.size * 2 + w2_bf.size * 2 + w3_pad.size * 2
        + (b1_f.size + b2_f.size + b3_pad.size) * 4 + B_pad * C_PAD * 4)
    cost = pl.CostEstimate(flops=flops, transcendentals=B_pad * C_PAD,
                           bytes_accessed=bytes_accessed)

    out = pl.pallas_call(
        latent_classifier_kernel,
        out_shape=jax.ShapeDtypeStruct((B_pad, C_PAD), jnp.float32),
        grid_spec=pltpu.PrefetchScalarGridSpec(
            num_scalar_prefetch=0,
            grid=grid,
            in_specs=[
                pl.BlockSpec((bb, D), lambda i: (i, 0)),      # z tile (pipelined)
                # Weights/biases are grid-invariant (index_map -> (0, 0)); at the
                # test latent_dim=512 their double buffers total ~1 MiB, so the
                # default pipelining is left in place.
                pl.BlockSpec((D, H1), lambda i: (0, 0)),      # w1 (bf16, resident)
                pl.BlockSpec((1, H1), lambda i: (0, 0)),      # b1 (f32)
                pl.BlockSpec((H1, H2), lambda i: (0, 0)),     # w2 (bf16)
                pl.BlockSpec((1, H2), lambda i: (0, 0)),      # b2 (f32)
                pl.BlockSpec((H2, C_PAD), lambda i: (0, 0)),  # w3 (bf16, lane padded)
                pl.BlockSpec((1, C_PAD), lambda i: (0, 0)),   # b3 (f32, lane padded)
            ],
            out_specs=pl.BlockSpec((bb, C_PAD), lambda i: (i, 0)),
        ),
        compiler_params=pltpu.CompilerParams(
            dimension_semantics=("parallel",),
            vmem_limit_bytes=48 * 1024 * 1024,
        ),
        cost_estimate=cost,
    )(z_bf, w1_bf, b1_f, w2_bf, b2_f, w3_pad, b3_pad)
    # Drop batch padding and the lane padding of the class axis.
    return out[:B, :C]


def init_params(key, latent_dim):
    """nn.Linear default init U(-1/sqrt(fan_in), 1/sqrt(fan_in)); weights stored
    transposed relative to PyTorch: (in, out)."""
    dims = [latent_dim, latent_dim // 2, latent_dim // 4, 4]
    params = []
    for i in range(3):
        key, kw, kb = jax.random.split(key, 3)
        fan_in, fan_out = dims[i], dims[i + 1]
        bound = 1.0 / jnp.sqrt(fan_in)
        w = jax.random.uniform(kw, (fan_in, fan_out), jnp.float32, -bound, bound)
        b = jax.random.uniform(kb, (1, fan_out), jnp.float32, -bound, bound)
        params += [w, b]
    return params


def reference_f32(z, w1, b1, w2, b2, w3, b3):
    h1 = jnp.maximum(z @ w1 + b1, 0.0)
    h2 = jnp.maximum(h1 @ w2 + b2, 0.0)
    return jax.nn.softmax(h2 @ w3 + b3, axis=1)


if __name__ == "__main__":
    # Small instance consistent with the module: latent_dim=512 -> 256 -> 128 -> 4.
    latent_dim = 512
    batch = 512  # yields a 2-step grid at block_b=256 (keeps both v7x TCs busy)

    key = jax.random.PRNGKey(0)
    kz, kp = jax.random.split(key)
    z = jax.random.normal(kz, (batch, latent_dim), dtype=jnp.float32)
    w1, b1, w2, b2, w3, b3 = init_params(kp, latent_dim)

    out = latent_classifier(z, w1, b1, w2, b2, w3, b3, block_b=256)
    out = jax.block_until_ready(out)

    ref = reference_f32(z, w1, b1, w2, b2, w3, b3)
    assert out.shape == (batch, 4)
    # bf16 matmul operands (f32 accumulation) -> loosened tolerance vs f32 reference.
    assert jnp.allclose(out, ref, atol=3e-2, rtol=0.0), "mismatch vs JAX f32 reference"
    assert jnp.allclose(jnp.sum(out, axis=1), 1.0, atol=1e-3), "softmax rows must sum to 1"
    assert bool(jnp.all(jnp.isfinite(out))), "non-finite outputs"

    print("KERNEL_OK")
</pallas_src>

<mosaic_0001>
module attributes {stable_mosaic.version = 11 : i64} {
  func.func @latent_classifier_kernel(%arg0: i32, %arg1: memref<256x512xbf16, #tpu.memory_space<vmem>>, %arg2: memref<512x256xbf16, #tpu.memory_space<vmem>>, %arg3: memref<1x256xf32, #tpu.memory_space<vmem>>, %arg4: memref<256x128xbf16, #tpu.memory_space<vmem>>, %arg5: memref<1x128xf32, #tpu.memory_space<vmem>>, %arg6: memref<128x128xbf16, #tpu.memory_space<vmem>>, %arg7: memref<1x128xf32, #tpu.memory_space<vmem>>, %arg8: memref<256x128xf32, #tpu.memory_space<vmem>>) attributes {dimension_semantics = [#tpu.dimension_semantics<parallel>], iteration_bounds = array<i64: 2>, scalar_prefetch = 0 : i64, scratch_operands = 0 : i64, tpu.core_type = #tpu.core_type<tc>, window_params = [{transform_indices = @transform_0, window_bounds = array<i64: 256, 512>}, {pipeline_mode = #tpu.pipeline_mode<synchronous>, transform_indices = @transform_1, window_bounds = array<i64: 512, 256>}, {pipeline_mode = #tpu.pipeline_mode<synchronous>, transform_indices = @transform_2, window_bounds = array<i64: 1, 256>}, {pipeline_mode = #tpu.pipeline_mode<synchronous>, transform_indices = @transform_3, window_bounds = array<i64: 256, 128>}, {pipeline_mode = #tpu.pipeline_mode<synchronous>, transform_indices = @transform_4, window_bounds = array<i64: 1, 128>}, {pipeline_mode = #tpu.pipeline_mode<synchronous>, transform_indices = @transform_5, window_bounds = array<i64: 128, 128>}, {pipeline_mode = #tpu.pipeline_mode<synchronous>, transform_indices = @transform_6, window_bounds = array<i64: 1, 128>}, {transform_indices = @transform_7, window_bounds = array<i64: 256, 128>}]} {
    %c0 = arith.constant 0 : index
    %c0_0 = arith.constant 0 : index
    %0 = vector.load %arg1[%c0, %c0_0] : memref<256x512xbf16, #tpu.memory_space<vmem>>, vector<256x512xbf16>
    %c0_1 = arith.constant 0 : index
    %c0_2 = arith.constant 0 : index
    %1 = vector.load %arg2[%c0_1, %c0_2] : memref<512x256xbf16, #tpu.memory_space<vmem>>, vector<512x256xbf16>
    %cst = arith.constant dense<0.000000e+00> : vector<256x256xf32>
    %2 = tpu.matmul %0, %1, %cst {dimension_numbers = #tpu.dot_dimension_numbers<[1], [0], [0], [1], [0, 0, 1, 1], [], []>} : vector<256x512xbf16>, vector<512x256xbf16>, vector<256x256xf32> -> vector<256x256xf32>
    %c0_3 = arith.constant 0 : index
    %c0_4 = arith.constant 0 : index
    %3 = vector.load %arg3[%c0_3, %c0_4] : memref<1x256xf32, #tpu.memory_space<vmem>>, vector<1x256xf32>
    %4 = vector.broadcast %3 : vector<1x256xf32> to vector<256x256xf32>
    %5 = arith.addf %2, %4 : vector<256x256xf32>
    %cst_5 = arith.constant 0.000000e+00 : f32
    %6 = vector.broadcast %cst_5 : f32 to vector<256x256xf32>
    %7 = arith.maximumf %5, %6 : vector<256x256xf32>
    %8 = arith.truncf %7 : vector<256x256xf32> to vector<256x256xbf16>
    %c0_6 = arith.constant 0 : index
    %c0_7 = arith.constant 0 : index
    %9 = vector.load %arg4[%c0_6, %c0_7] : memref<256x128xbf16, #tpu.memory_space<vmem>>, vector<256x128xbf16>
    %cst_8 = arith.constant dense<0.000000e+00> : vector<256x128xf32>
    %10 = tpu.matmul %8, %9, %cst_8 {dimension_numbers = #tpu.dot_dimension_numbers<[1], [0], [0], [1], [0, 0, 1, 1], [], []>} : vector<256x256xbf16>, vector<256x128xbf16>, vector<256x128xf32> -> vector<256x128xf32>
    %c0_9 = arith.constant 0 : index
    %c0_10 = arith.constant 0 : index
    %11 = vector.load %arg5[%c0_9, %c0_10] : memref<1x128xf32, #tpu.memory_space<vmem>>, vector<1x128xf32>
    %12 = vector.broadcast %11 : vector<1x128xf32> to vector<256x128xf32>
    %13 = arith.addf %10, %12 : vector<256x128xf32>
    %cst_11 = arith.constant 0.000000e+00 : f32
    %14 = vector.broadcast %cst_11 : f32 to vector<256x128xf32>
    %15 = arith.maximumf %13, %14 : vector<256x128xf32>
    %16 = arith.truncf %15 : vector<256x128xf32> to vector<256x128xbf16>
    %c0_12 = arith.constant 0 : index
    %c0_13 = arith.constant 0 : index
    %17 = vector.load %arg6[%c0_12, %c0_13] : memref<128x128xbf16, #tpu.memory_space<vmem>>, vector<128x128xbf16>
    %cst_14 = arith.constant dense<0.000000e+00> : vector<256x128xf32>
    %18 = tpu.matmul %16, %17, %cst_14 {dimension_numbers = #tpu.dot_dimension_numbers<[1], [0], [0], [1], [0, 0, 1, 1], [], []>} : vector<256x128xbf16>, vector<128x128xbf16>, vector<256x128xf32> -> vector<256x128xf32>
    %c0_15 = arith.constant 0 : index
    %c0_16 = arith.constant 0 : index
    %19 = vector.load %arg7[%c0_15, %c0_16] : memref<1x128xf32, #tpu.memory_space<vmem>>, vector<1x128xf32>
    %20 = vector.broadcast %19 : vector<1x128xf32> to vector<256x128xf32>
    %21 = arith.addf %18, %20 : vector<256x128xf32>
    %cst_17 = arith.constant dense<0xFF800000> : vector<256xf32>
    %22 = vector.multi_reduction <maximumf>, %21, %cst_17 [1] : vector<256x128xf32> to vector<256xf32>
    %23 = vector.shape_cast %22 : vector<256xf32> to vector<256x1xf32>
    %24 = vector.broadcast %23 : vector<256x1xf32> to vector<256x128xf32>
    %25 = arith.subf %21, %24 : vector<256x128xf32>
    %26 = math.exp %25 : vector<256x128xf32>
    %cst_18 = arith.constant dense<0.000000e+00> : vector<256xf32>
    %27 = vector.multi_reduction <add>, %26, %cst_18 [1] : vector<256x128xf32> to vector<256xf32>
    %28 = vector.shape_cast %27 : vector<256xf32> to vector<256x1xf32>
    %29 = tpu.reciprocal %28 {approx = true} : vector<256x1xf32> -> vector<256x1xf32>
    %30 = vector.broadcast %29 : vector<256x1xf32> to vector<256x128xf32>
    %31 = arith.mulf %26, %30 : vector<256x128xf32>
    %c0_19 = arith.constant 0 : index
    %c0_20 = arith.constant 0 : index
    %32 = vector.load %arg8[%c0_19, %c0_20] : memref<256x128xf32, #tpu.memory_space<vmem>>, vector<256x128xf32>
    tpu.vector_store %arg8[%c0_19, %c0_20], %31 {strides = array<i32>} : memref<256x128xf32, #tpu.memory_space<vmem>>, vector<256x128xf32>,
    return
  }
  func.func @transform_0(%arg0: i32) -> (i32, i32) {
    %c0_i32 = arith.constant 0 : i32
    %c0_i32_0 = arith.constant 0 : i32
    return %arg0, %c0_i32 : i32, i32
  }
  func.func @transform_1(%arg0: i32) -> (i32, i32) {
    %c0_i32 = arith.constant 0 : i32
    %c0_i32_0 = arith.constant 0 : i32
    %c0_i32_1 = arith.constant 0 : i32
    return %c0_i32, %c0_i32_0 : i32, i32
  }
  func.func @transform_2(%arg0: i32) -> (i32, i32) {
    %c0_i32 = arith.constant 0 : i32
    %c0_i32_0 = arith.constant 0 : i32
    %c0_i32_1 = arith.constant 0 : i32
    return %c0_i32, %c0_i32_0 : i32, i32
  }
  func.func @transform_3(%arg0: i32) -> (i32, i32) {
    %c0_i32 = arith.constant 0 : i32
    %c0_i32_0 = arith.constant 0 : i32
    %c0_i32_1 = arith.constant 0 : i32
    return %c0_i32, %c0_i32_0 : i32, i32
  }
  func.func @transform_4(%arg0: i32) -> (i32, i32) {
    %c0_i32 = arith.constant 0 : i32
    %c0_i32_0 = arith.constant 0 : i32
    %c0_i32_1 = arith.constant 0 : i32
    return %c0_i32, %c0_i32_0 : i32, i32
  }
  func.func @transform_5(%arg0: i32) -> (i32, i32) {
    %c0_i32 = arith.constant 0 : i32
    %c0_i32_0 = arith.constant 0 : i32
    %c0_i32_1 = arith.constant 0 : i32
    return %c0_i32, %c0_i32_0 : i32, i32
  }
  func.func @transform_6(%arg0: i32) -> (i32, i32) {
    %c0_i32 = arith.constant 0 : i32
    %c0_i32_0 = arith.constant 0 : i32
    %c0_i32_1 = arith.constant 0 : i32
    return %c0_i32, %c0_i32_0 : i32, i32
  }
  func.func @transform_7(%arg0: i32) -> (i32, i32) {
    %c0_i32 = arith.constant 0 : i32
    %c0_i32_0 = arith.constant 0 : i32
    return %arg0, %c0_i32 : i32, i32
  }
}

</mosaic_0001>

<llo_original>
// kernel: latent_classifier.1
$region0: #{latent_classifier.1}
  #allocation0 [shape = 'u32[]', space=smem, size = 0x4, offset = 0x4, fixed_abs, tag = 'smem constant byte address 0x4 - core index']
  #allocation1 [shape = 'u32[72,128]{1,0:T(1,128)}', space=vmem, size = 0x9000, scoped, tag = 'internal scratch']
  %s0 = inlined_call_operand.vmem [shape: bf16[512,512], index: 0, kind: input, shape index: {}]
  %s1 = inlined_call_operand.vmem [shape: bf16[512,256], index: 1, kind: input, shape index: {}]
  %s2 = inlined_call_operand.vmem [shape: f32[1,256], index: 2, kind: input, shape index: {}]
  %s3 = inlined_call_operand.vmem [shape: bf16[256,128], index: 3, kind: input, shape index: {}]
  %s4 = inlined_call_operand.vmem [shape: f32[1,128], index: 4, kind: input, shape index: {}]
  %s5 = inlined_call_operand.vmem [shape: bf16[128,128], index: 5, kind: input, shape index: {}]
  %s6 = inlined_call_operand.vmem [shape: f32[1,128], index: 6, kind: input, shape index: {}]
  %s7 = inlined_call_operand.vmem [shape: f32[512,128], index: 7, kind: output, shape index: {}]
  %s8 = sld [smem:[#allocation0]]
  $region61: #{latent_classifier.1} parent=0
    _
  %s10 = ssub.s32 1, %s8
  %s11 = scalar_select 0, %s10, %s8
  loop: start=0, step=1, limit=4
  $region2: #{latent_classifier.1} parent=0 // loop_pre_header
    _
  $region3: #{latent_classifier.1} parent=0 // loop_header
    %s13 = sphi 0, %s17
    %p14 = scmp.ge.s32.totalorder %s13, 4
    %s23 = sphi 0, %s25
    %s26 = sphi 0, %s23
    %s27 = sphi 0, %s26
    %s43 = sphi 0, %s27
    %s47 = sphi 0, %s47
    %s49 = sphi 0, %s47
    %s50 = sphi 0, %s49
    %s64 = sphi 0, %s50
    %s68 = sphi 0, %s68
    %s70 = sphi 0, %s68
    %s71 = sphi 0, %s70
    %s85 = sphi 0, %s71
    %s89 = sphi 0, %s89
    %s91 = sphi 0, %s89
    %s92 = sphi 0, %s91
    %s106 = sphi 0, %s92
    %s110 = sphi 0, %s110
    %s112 = sphi 0, %s110
    %s113 = sphi 0, %s112
    %s127 = sphi 0, %s113
    %s131 = sphi 0, %s131
    %s133 = sphi 0, %s131
    %s134 = sphi 0, %s133
    %s148 = sphi 0, %s134
    %s152 = sphi 0, %s152
    %s154 = sphi 0, %s152
    %s155 = sphi 0, %s154
    %s169 = sphi 0, %s155
    %s175 = sphi 0, %s177
    %s178 = sphi 0, %s175
    %s179 = sphi 0, %s178
    %s195 = sphi 0, %s179
  $region4: #{latent_classifier.1} parent=0 // loop_header_branch
    %16 = sbr.rel (%p14) target = $region8
  $region5: #{latent_classifier.1} parent=0 // loop_body
    %s18 = ssub.s32 %s13, 1
    %s19 = ssub.s32 %s13, 2
    %s20 = sadd.s32 %s13, 1
    %s21 = ssub.s32 %s13, %s20
    %p22 = scmp.eq.s32.totalorder %s21, 0
    %s24 = sadd.s32 %s23, 1
    %s25 = scalar_select %p22, %s23, %s24
    %p28 = pneg %p22
    %p29 = scmp.eq.s32.totalorder %s13, 1
    %p30 = por %p28, %p29
    %p31 = scmp.ne.s32.totalorder %s23, %s26
    %p32 = scmp.eq.s32.totalorder %s13, 0
    %p33 = por %p31, %p32
    %p34 = scmp.ne.s32.totalorder %s23, %s26
    %p35 = scmp.eq.s32.totalorder %s18, 1
    %p36 = por %p34, %p35
    %p37 = scmp.ne.s32.totalorder %s26, %s27
    %p38 = scmp.eq.s32.totalorder %s18, 0
    %p39 = por %p37, %p38
    %p40 = scmp.ne.s32.totalorder %s26, %s27
    %p41 = scmp.eq.s32.totalorder %s19, 1
    %p42 = por %p40, %p41
    %p44 = scmp.ne.s32.totalorder %s27, %s43
    %p45 = scmp.eq.s32.totalorder %s19, 0
    %p46 = por %p44, %p45
    %s48 = sadd.s32 %s47, 1
    %p51 = scmp.eq.s32.totalorder %s13, 1
    %p52 = scmp.ne.s32.totalorder %s47, %s49
    %p53 = scmp.eq.s32.totalorder %s13, 0
    %p54 = por %p52, %p53
    %p55 = scmp.ne.s32.totalorder %s47, %s49
    %p56 = scmp.eq.s32.totalorder %s18, 1
    %p57 = por %p55, %p56
    %p58 = scmp.ne.s32.totalorder %s49, %s50
    %p59 = scmp.eq.s32.totalorder %s18, 0
    %p60 = por %p58, %p59
    %p61 = scmp.ne.s32.totalorder %s49, %s50
    %p62 = scmp.eq.s32.totalorder %s19, 1
    %p63 = por %p61, %p62
    %p65 = scmp.ne.s32.totalorder %s50, %s64
    %p66 = scmp.eq.s32.totalorder %s19, 0
    %p67 = por %p65, %p66
    %s69 = sadd.s32 %s68, 1
    %p72 = scmp.eq.s32.totalorder %s13, 1
    %p73 = scmp.ne.s32.totalorder %s68, %s70
    %p74 = scmp.eq.s32.totalorder %s13, 0
    %p75 = por %p73, %p74
    %p76 = scmp.ne.s32.totalorder %s68, %s70
    %p77 = scmp.eq.s32.totalorder %s18, 1
    %p78 = por %p76, %p77
    %p79 = scmp.ne.s32.totalorder %s70, %s71
    %p80 = scmp.eq.s32.totalorder %s18, 0
    %p81 = por %p79, %p80
    %p82 = scmp.ne.s32.totalorder %s70, %s71
    %p83 = scmp.eq.s32.totalorder %s19, 1
    %p84 = por %p82, %p83
    %p86 = scmp.ne.s32.totalorder %s71, %s85
    %p87 = scmp.eq.s32.totalorder %s19, 0
    %p88 = por %p86, %p87
    %s90 = sadd.s32 %s89, 1
    %p93 = scmp.eq.s32.totalorder %s13, 1
    %p94 = scmp.ne.s32.totalorder %s89, %s91
    %p95 = scmp.eq.s32.totalorder %s13, 0
    %p96 = por %p94, %p95
    %p97 = scmp.ne.s32.totalorder %s89, %s91
    %p98 = scmp.eq.s32.totalorder %s18, 1
    %p99 = por %p97, %p98
    %p100 = scmp.ne.s32.totalorder %s91, %s92
    %p101 = scmp.eq.s32.totalorder %s18, 0
    %p102 = por %p100, %p101
    %p103 = scmp.ne.s32.totalorder %s91, %s92
    %p104 = scmp.eq.s32.totalorder %s19, 1
    %p105 = por %p103, %p104
    %p107 = scmp.ne.s32.totalorder %s92, %s106
    %p108 = scmp.eq.s32.totalorder %s19, 0
    %p109 = por %p107, %p108
    %s111 = sadd.s32 %s110, 1
    %p114 = scmp.eq.s32.totalorder %s13, 1
    %p115 = scmp.ne.s32.totalorder %s110, %s112
    %p116 = scmp.eq.s32.totalorder %s13, 0
    %p117 = por %p115, %p116
    %p118 = scmp.ne.s32.totalorder %s110, %s112
    %p119 = scmp.eq.s32.totalorder %s18, 1
    %p120 = por %p118, %p119
    %p121 = scmp.ne.s32.totalorder %s112, %s113
    %p122 = scmp.eq.s32.totalorder %s18, 0
    %p123 = por %p121, %p122
    %p124 = scmp.ne.s32.totalorder %s112, %s113
    %p125 = scmp.eq.s32.totalorder %s19, 1
    %p126 = por %p124, %p125
    %p128 = scmp.ne.s32.totalorder %s113, %s127
    %p129 = scmp.eq.s32.totalorder %s19, 0
    %p130 = por %p128, %p129
    %s132 = sadd.s32 %s131, 1
    %p135 = scmp.eq.s32.totalorder %s13, 1
    %p136 = scmp.ne.s32.totalorder %s131, %s133
    %p137 = scmp.eq.s32.totalorder %s13, 0
    %p138 = por %p136, %p137
    %p139 = scmp.ne.s32.totalorder %s131, %s133
    %p140 = scmp.eq.s32.totalorder %s18, 1
    %p141 = por %p139, %p140
    %p142 = scmp.ne.s32.totalorder %s133, %s134
    %p143 = scmp.eq.s32.totalorder %s18, 0
    %p144 = por %p142, %p143
    %p145 = scmp.ne.s32.totalorder %s133, %s134
    %p146 = scmp.eq.s32.totalorder %s19, 1
    %p147 = por %p145, %p146
    %p149 = scmp.ne.s32.totalorder %s134, %s148
    %p150 = scmp.eq.s32.totalorder %s19, 0
    %p151 = por %p149, %p150
    %s153 = sadd.s32 %s152, 1
    %p156 = scmp.eq.s32.totalorder %s13, 1
    %p157 = scmp.ne.s32.totalorder %s152, %s154
    %p158 = scmp.eq.s32.totalorder %s13, 0
    %p159 = por %p157, %p158
    %p160 = scmp.ne.s32.totalorder %s152, %s154
    %p161 = scmp.eq.s32.totalorder %s18, 1
    %p162 = por %p160, %p161
    %p163 = scmp.ne.s32.totalorder %s154, %s155
    %p164 = scmp.eq.s32.totalorder %s18, 0
    %p165 = por %p163, %p164
    %p166 = scmp.ne.s32.totalorder %s154, %s155
    %p167 = scmp.eq.s32.totalorder %s19, 1
    %p168 = por %p166, %p167
    %p170 = scmp.ne.s32.totalorder %s155, %s169
    %p171 = scmp.eq.s32.totalorder %s19, 0
    %p172 = por %p170, %p171
    %s173 = ssub.s32 %s13, %s20
    %p174 = scmp.eq.s32.totalorder %s173, 0
    %s176 = sadd.s32 %s175, 1
    %s177 = scalar_select %p174, %s175, %s176
    %p180 = pneg %p174
    %p181 = scmp.eq.s32.totalorder %s13, 1
    %p182 = por %p180, %p181
    %p183 = scmp.ne.s32.totalorder %s175, %s178
    %p184 = scmp.eq.s32.totalorder %s13, 0
    %p185 = por %p183, %p184
    %p186 = scmp.ne.s32.totalorder %s175, %s178
    %p187 = scmp.eq.s32.totalorder %s18, 1
    %p188 = por %p186, %p187
    %p189 = scmp.ne.s32.totalorder %s178, %s179
    %p190 = scmp.eq.s32.totalorder %s18, 0
    %p191 = por %p189, %p190
    %p192 = scmp.ne.s32.totalorder %s178, %s179
    %p193 = scmp.eq.s32.totalorder %s19, 1
    %p194 = por %p192, %p193
    %p196 = scmp.ne.s32.totalorder %s179, %s195
    %p197 = scmp.eq.s32.totalorder %s19, 0
    %p198 = por %p196, %p197
    %p199 = scmp.le.s32.totalorder 1, %s13
    %p200 = scmp.lt.s32.totalorder %s13, 3
    %p201 = pnand %p199, %p200
    %p202 = pneg %p201
    // Predicated region
    $region9: #{latent_classifier.1} parent=5 // pred_check
      _
    $region10: #{latent_classifier.1} parent=5 // pred_check_branch
      %204 = sbr.rel (%p201) target = $region12
    $region11: #{latent_classifier.1} parent=5 // pred_region
      %s205 = ssub.s32 %s13, 1
      // Predicated region
      $region13: #{latent_classifier.1} parent=11 // pred_check
        %p206 = pneg %p60
      $region14: #{latent_classifier.1} parent=11 // pred_check_branch
        %208 = sbr.rel (%p206) target = $region16
      $region15: #{latent_classifier.1} parent=11 // pred_region
        _
      $region16: #{latent_classifier.1} parent=11 // pred_fallthru
        _
      // Predicated region
      $region17: #{latent_classifier.1} parent=11 // pred_check
        %p209 = pneg %p81
      $region18: #{latent_classifier.1} parent=11 // pred_check_branch
        %211 = sbr.rel (%p209) target = $region20
      $region19: #{latent_classifier.1} parent=11 // pred_region
        _
      $region20: #{latent_classifier.1} parent=11 // pred_fallthru
        _
      // Predicated region
      $region21: #{latent_classifier.1} parent=11 // pred_check
        %p212 = pneg %p102
      $region22: #{latent_classifier.1} parent=11 // pred_check_branch
        %214 = sbr.rel (%p212) target = $region24
      $region23: #{latent_classifier.1} parent=11 // pred_region
        _
      $region24: #{latent_classifier.1} parent=11 // pred_fallthru
        _
      // Predicated region
      $region25: #{latent_classifier.1} parent=11 // pred_check
        %p215 = pneg %p123
      $region26: #{latent_classifier.1} parent=11 // pred_check_branch
        %217 = sbr.rel (%p215) target = $region28
      $region27: #{latent_classifier.1} parent=11 // pred_region
        _
      $region28: #{latent_classifier.1} parent=11 // pred_fallthru
        _
      // Predicated region
      $region29: #{latent_classifier.1} parent=11 // pred_check
        %p218 = pneg %p144
      $region30: #{latent_classifier.1} parent=11 // pred_check_branch
        %220 = sbr.rel (%p218) target = $region32
      $region31: #{latent_classifier.1} parent=11 // pred_region
        _
      $region32: #{latent_classifier.1} parent=11 // pred_fallthru
        _
      // Predicated region
      $region33: #{latent_classifier.1} parent=11 // pred_check
        %p221 = pneg %p165
      $region34: #{latent_classifier.1} parent=11 // pred_check_branch
        %223 = sbr.rel (%p221) target = $region36
      $region35: #{latent_classifier.1} parent=11 // pred_region
        _
      $region36: #{latent_classifier.1} parent=11 // pred_fallthru
        _
    $region12: #{latent_classifier.1} parent=5 // pred_fallthru
      _
    %p224 = scmp.lt.s32.totalorder %s13, 2
    // Predicated region
    $region37: #{latent_classifier.1} parent=5 // pred_check
      %p225 = pneg %p224
    $region38: #{latent_classifier.1} parent=5 // pred_check_branch
      %227 = sbr.rel (%p225) target = $region40
    $region39: #{latent_classifier.1} parent=5 // pred_region
      // Predicated region
      $region41: #{latent_classifier.1} parent=39 // pred_check
        %p228 = pneg %p33
      $region42: #{latent_classifier.1} parent=39 // pred_check_branch
        %230 = sbr.rel (%p228) target = $region44
      $region43: #{latent_classifier.1} parent=39 // pred_region
        %s231 = smul.u32 32, %s13
        %p232 = scmp.lt.s32.totalorder %s231, 63
        %s233 = scalar_select %p232, %s231, 63
        %s234 = smul.addr %s233, 4
        %s235 = smul.addr %s234, 4
        %s236 = scalar_lea.vmem %s0, %s235
        %s237 = smul.u32 32, %s13
      $region44: #{latent_classifier.1} parent=39 // pred_fallthru
        _
    $region40: #{latent_classifier.1} parent=5 // pred_fallthru
      _
    %p238 = scmp.le.s32.totalorder 1, %s13
    %p239 = scmp.lt.s32.totalorder %s13, 3
    %p240 = pnand %p238, %p239
    %p241 = pneg %p240
    // Predicated region
    $region45: #{latent_classifier.1} parent=5 // pred_check
      _
    $region46: #{latent_classifier.1} parent=5 // pred_check_branch
      %243 = sbr.rel (%p240) target = $region48
    $region47: #{latent_classifier.1} parent=5 // pred_region
      %s244 = ssub.s32 %s13, 1
      %s245 = smul.u32 32, %s18
      %p246 = scmp.lt.s32.totalorder %s245, 63
      %s247 = scalar_select %p246, %s245, 63
      %s248 = smul.addr %s247, 4
      %s249 = smul.addr %s248, 4
      %s250 = scalar_lea.vmem %s0, %s249
      %p251 = pneg %p39
      %p252 = pneg %p36
      %p253 = pneg %p60
      %p254 = pneg %p57
      %p255 = pneg %p81
      %p256 = pneg %p78
      %p257 = pneg %p102
      %p258 = pneg %p99
      %p259 = pneg %p123
      %p260 = pneg %p120
      %p261 = pneg %p144
      %p262 = pneg %p141
      %p263 = pneg %p165
      %p264 = pneg %p162
      %p265 = pneg %p191
      %p266 = pneg %p188
      %s267 = smul.u32 32, %s18
      %p268 = scmp.lt.s32.totalorder %s267, 63
      %s269 = scalar_select %p268, %s267, 63
      %s270 = smul.addr %s269, 8
      %s271 = scalar_lea.vmem %s7, %s270
      %s272 = smul.u32 32, %s18
      %p273 = scmp.lt.s32.totalorder %s272, 63
      %s274 = scalar_select %p273, %s272, 63
      %s275 = smul.addr %s274, 4
      %s276 = smul.addr %s275, 4
      %s277 = scalar_lea.vmem %s0, %s276
      %s278 = smul.u32 32, %s18
      %s279 = smul.u32 32, %s18
      %p280 = scmp.lt.s32.totalorder %s279, 63
      %s281 = scalar_select %p280, %s279, 63
      %s282 = smul.addr %s281, 8
      %s283 = scalar_lea.vmem %s7, %s282
      %s284 = smul.u32 32, %s18
      %v285 = vld [vmem:[%s277] sm:$0xff]
      %v286 = vld [vmem:[%s277 + $0x8] sm:$0xff]
      %v287 = vld [vmem:[%s277 + $0x10] sm:$0xff]
      %v288 = vld [vmem:[%s277 + $0x18] sm:$0xff]
      %v289 = vld [vmem:[%s277 + $0x20] sm:$0xff]
      %v290 = vld [vmem:[%s277 + $0x28] sm:$0xff]
      %v291 = vld [vmem:[%s277 + $0x30] sm:$0xff]
      %v292 = vld [vmem:[%s277 + $0x38] sm:$0xff]
      %v293 = vld [vmem:[%s277 + $0x40] sm:$0xff]
      %v294 = vld [vmem:[%s277 + $0x48] sm:$0xff]
      %v295 = vld [vmem:[%s277 + $0x50] sm:$0xff]
      %v296 = vld [vmem:[%s277 + $0x58] sm:$0xff]
      %v297 = vld [vmem:[%s277 + $0x60] sm:$0xff]
      %v298 = vld [vmem:[%s277 + $0x68] sm:$0xff]
      %v299 = vld [vmem:[%s277 + $0x70] sm:$0xff]
      %v300 = vld [vmem:[%s277 + $0x78] sm:$0xff]
      %v301 = vld [vmem:[%s277 + $0x80] sm:$0xff]
      %v302 = vld [vmem:[%s277 + $0x88] sm:$0xff]
      %v303 = vld [vmem:[%s277 + $0x90] sm:$0xff]
      %v304 = vld [vmem:[%s277 + $0x98] sm:$0xff]
      %v305 = vld [vmem:[%s277 + $0xa0] sm:$0xff]
      %v306 = vld [vmem:[%s277 + $0xa8] sm:$0xff]
      %v307 = vld [vmem:[%s277 + $0xb0] sm:$0xff]
      %v308 = vld [vmem:[%s277 + $0xb8] sm:$0xff]
      %v309 = vld [vmem:[%s277 + $0xc0] sm:$0xff]
      %v310 = vld [vmem:[%s277 + $0xc8] sm:$0xff]
      %v311 = vld [vmem:[%s277 + $0xd0] sm:$0xff]
      %v312 = vld [vmem:[%s277 + $0xd8] sm:$0xff]
      %v313 = vld [vmem:[%s277 + $0xe0] sm:$0xff]
      %v314 = vld [vmem:[%s277 + $0xe8] sm:$0xff]
      %v315 = vld [vmem:[%s277 + $0xf0] sm:$0xff]
      %v316 = vld [vmem:[%s277 + $0xf8] sm:$0xff]
      %v317 = vld [vmem:[%s277 + $0x100] sm:$0xff]
      %v318 = vld [vmem:[%s277 + $0x108] sm:$0xff]
      %v319 = vld [vmem:[%s277 + $0x110] sm:$0xff]
      %v320 = vld [vmem:[%s277 + $0x118] sm:$0xff]
      %v321 = vld [vmem:[%s277 + $0x120] sm:$0xff]
      %v322 = vld [vmem:[%s277 + $0x128] sm:$0xff]
      %v323 = vld [vmem:[%s277 + $0x130] sm:$0xff]
      %v324 = vld [vmem:[%s277 + $0x138] sm:$0xff]
      %v325 = vld [vmem:[%s277 + $0x140] sm:$0xff]
      %v326 = vld [vmem:[%s277 + $0x148] sm:$0xff]
      %v327 = vld [vmem:[%s277 + $0x150] sm:$0xff]
      %v328 = vld [vmem:[%s277 + $0x158] sm:$0xff]
      %v329 = vld [vmem:[%s277 + $0x160] sm:$0xff]
      %v330 = vld [vmem:[%s277 + $0x168] sm:$0xff]
      %v331 = vld [vmem:[%s277 + $0x170] sm:$0xff]
      %v332 = vld [vmem:[%s277 + $0x178] sm:$0xff]
      %v333 = vld [vmem:[%s277 + $0x180] sm:$0xff]
      %v334 = vld [vmem:[%s277 + $0x188] sm:$0xff]
      %v335 = vld [vmem:[%s277 + $0x190] sm:$0xff]
      %v336 = vld [vmem:[%s277 + $0x198] sm:$0xff]
      %v337 = vld [vmem:[%s277 + $0x1a0] sm:$0xff]
      %v338 = vld [vmem:[%s277 + $0x1a8] sm:$0xff]
      %v339 = vld [vmem:[%s277 + $0x1b0] sm:$0xff]
      %v340 = vld [vmem:[%s277 + $0x1b8] sm:$0xff]
      %v341 = vld [vmem:[%s277 + $0x1c0] sm:$0xff]
      %v342 = vld [vmem:[%s277 + $0x1c8] sm:$0xff]
      %v343 = vld [vmem:[%s277 + $0x1d0] sm:$0xff]
      %v344 = vld [vmem:[%s277 + $0x1d8] sm:$0xff]
      %v345 = vld [vmem:[%s277 + $0x1e0] sm:$0xff]
      %v346 = vld [vmem:[%s277 + $0x1e8] sm:$0xff]
      %v347 = vld [vmem:[%s277 + $0x1f0] sm:$0xff]
      %v348 = vld [vmem:[%s277 + $0x1f8] sm:$0xff]
      %v349 = vld [vmem:[%s1] sm:$0xff]
      %v350 = vld [vmem:[%s1 + $0x8] sm:$0xff]
      %v351 = vld [vmem:[%s1 + $0x10] sm:$0xff]
      %v352 = vld [vmem:[%s1 + $0x18] sm:$0xff]
      %v353 = vld [vmem:[%s1 + $0x20] sm:$0xff]
      %v354 = vld [vmem:[%s1 + $0x28] sm:$0xff]
      %v355 = vld [vmem:[%s1 + $0x30] sm:$0xff]
      %v356 = vld [vmem:[%s1 + $0x38] sm:$0xff]
      %v357 = vld [vmem:[%s1 + $0x40] sm:$0xff]
      %v358 = vld [vmem:[%s1 + $0x48] sm:$0xff]
      %v359 = vld [vmem:[%s1 + $0x50] sm:$0xff]
      %v360 = vld [vmem:[%s1 + $0x58] sm:$0xff]
      %v361 = vld [vmem:[%s1 + $0x60] sm:$0xff]
      %v362 = vld [vmem:[%s1 + $0x68] sm:$0xff]
      %v363 = vld [vmem:[%s1 + $0x70] sm:$0xff]
      %v364 = vld [vmem:[%s1 + $0x78] sm:$0xff]
      %v365 = vld [vmem:[%s1 + $0x80] sm:$0xff]
      %v366 = vld [vmem:[%s1 + $0x88] sm:$0xff]
      %v367 = vld [vmem:[%s1 + $0x90] sm:$0xff]
      %v368 = vld [vmem:[%s1 + $0x98] sm:$0xff]
      %v369 = vld [vmem:[%s1 + $0xa0] sm:$0xff]
      %v370 = vld [vmem:[%s1 + $0xa8] sm:$0xff]
      %v371 = vld [vmem:[%s1 + $0xb0] sm:$0xff]
      %v372 = vld [vmem:[%s1 + $0xb8] sm:$0xff]
      %v373 = vld [vmem:[%s1 + $0xc0] sm:$0xff]
      %v374 = vld [vmem:[%s1 + $0xc8] sm:$0xff]
      %v375 = vld [vmem:[%s1 + $0xd0] sm:$0xff]
      %v376 = vld [vmem:[%s1 + $0xd8] sm:$0xff]
      %v377 = vld [vmem:[%s1 + $0xe0] sm:$0xff]
      %v378 = vld [vmem:[%s1 + $0xe8] sm:$0xff]
      %v379 = vld [vmem:[%s1 + $0xf0] sm:$0xff]
      %v380 = vld [vmem:[%s1 + $0xf8] sm:$0xff]
      %v381 = vld [vmem:[%s1 + $0x100] sm:$0xff]
      %v382 = vld [vmem:[%s1 + $0x108] sm:$0xff]
      %v383 = vld [vmem:[%s1 + $0x110] sm:$0xff]
      %v384 = vld [vmem:[%s1 + $0x118] sm:$0xff]
      %v385 = vld [vmem:[%s1 + $0x120] sm:$0xff]
      %v386 = vld [vmem:[%s1 + $0x128] sm:$0xff]
      %v387 = vld [vmem:[%s1 + $0x130] sm:$0xff]
      %v388 = vld [vmem:[%s1 + $0x138] sm:$0xff]
      %v389 = vld [vmem:[%s1 + $0x140] sm:$0xff]
      %v390 = vld [vmem:[%s1 + $0x148] sm:$0xff]
      %v391 = vld [vmem:[%s1 + $0x150] sm:$0xff]
      %v392 = vld [vmem:[%s1 + $0x158] sm:$0xff]
      %v393 = vld [vmem:[%s1 + $0x160] sm:$0xff]
      %v394 = vld [vmem:[%s1 + $0x168] sm:$0xff]
      %v395 = vld [vmem:[%s1 + $0x170] sm:$0xff]
      %v396 = vld [vmem:[%s1 + $0x178] sm:$0xff]
      %v397 = vld [vmem:[%s1 + $0x180] sm:$0xff]
      %v398 = vld [vmem:[%s1 + $0x188] sm:$0xff]
      %v399 = vld [vmem:[%s1 + $0x190] sm:$0xff]
      %v400 = vld [vmem:[%s1 + $0x198] sm:$0xff]
      %v401 = vld [vmem:[%s1 + $0x1a0] sm:$0xff]
      %v402 = vld [vmem:[%s1 + $0x1a8] sm:$0xff]
      %v403 = vld [vmem:[%s1 + $0x1b0] sm:$0xff]
      %v404 = vld [vmem:[%s1 + $0x1b8] sm:$0xff]
      %v405 = vld [vmem:[%s1 + $0x1c0] sm:$0xff]
      %v406 = vld [vmem:[%s1 + $0x1c8] sm:$0xff]
      %v407 = vld [vmem:[%s1 + $0x1d0] sm:$0xff]
      %v408 = vld [vmem:[%s1 + $0x1d8] sm:$0xff]
      %v409 = vld [vmem:[%s1 + $0x1e0] sm:$0xff]
      %v410 = vld [vmem:[%s1 + $0x1e8] sm:$0xff]
      %v411 = vld [vmem:[%s1 + $0x1f0] sm:$0xff]
      %v412 = vld [vmem:[%s1 + $0x1f8] sm:$0xff]
      %v413 = vld [vmem:[%s2] sm:$0x3]
      %v415 = vperm.slane %v413, 0
      %v416 = vperm.slane %v413, 1
      %v483 = vunpack.c.l.b16 %v285
      %v484 = vunpack.c.h.b16 %v285
      %v485 = vunpack.c.l.b16 %v286
      %v486 = vunpack.c.h.b16 %v286
      %v487 = vunpack.c.l.b16 %v287
      %v488 = vunpack.c.h.b16 %v287
      %v489 = vunpack.c.l.b16 %v288
      %v490 = vunpack.c.h.b16 %v288
      %v491 = vunpack.c.l.b16 %v289
      %v492 = vunpack.c.h.b16 %v289
      %v493 = vunpack.c.l.b16 %v290
      %v494 = vunpack.c.h.b16 %v290
      %v495 = vunpack.c.l.b16 %v291
      %v496 = vunpack.c.h.b16 %v291
      %v497 = vunpack.c.l.b16 %v292
      %v498 = vunpack.c.h.b16 %v292
      %v499 = vunpack.c.l.b16 %v293
      %v500 = vunpack.c.h.b16 %v293
      %v501 = vunpack.c.l.b16 %v294
      %v502 = vunpack.c.h.b16 %v294
      %v503 = vunpack.c.l.b16 %v295
      %v504 = vunpack.c.h.b16 %v295
      %v505 = vunpack.c.l.b16 %v296
      %v506 = vunpack.c.h.b16 %v296
      %v507 = vunpack.c.l.b16 %v297
      %v508 = vunpack.c.h.b16 %v297
      %v509 = vunpack.c.l.b16 %v298
      %v510 = vunpack.c.h.b16 %v298
      %v511 = vunpack.c.l.b16 %v299
      %v512 = vunpack.c.h.b16 %v299
      %v513 = vunpack.c.l.b16 %v300
      %v514 = vunpack.c.h.b16 %v300
      %v515 = vunpack.c.l.b16 %v301
      %v516 = vunpack.c.h.b16 %v301
      %v517 = vunpack.c.l.b16 %v302
      %v518 = vunpack.c.h.b16 %v302
      %v519 = vunpack.c.l.b16 %v303
      %v520 = vunpack.c.h.b16 %v303
      %v521 = vunpack.c.l.b16 %v304
      %v522 = vunpack.c.h.b16 %v304
      %v523 = vunpack.c.l.b16 %v305
      %v524 = vunpack.c.h.b16 %v305
      %v525 = vunpack.c.l.b16 %v306
      %v526 = vunpack.c.h.b16 %v306
      %v527 = vunpack.c.l.b16 %v307
      %v528 = vunpack.c.h.b16 %v307
      %v529 = vunpack.c.l.b16 %v308
      %v530 = vunpack.c.h.b16 %v308
      %v531 = vunpack.c.l.b16 %v309
      %v532 = vunpack.c.h.b16 %v309
      %v533 = vunpack.c.l.b16 %v310
      %v534 = vunpack.c.h.b16 %v310
      %v535 = vunpack.c.l.b16 %v311
      %v536 = vunpack.c.h.b16 %v311
      %v537 = vunpack.c.l.b16 %v312
      %v538 = vunpack.c.h.b16 %v312
      %v539 = vunpack.c.l.b16 %v313
      %v540 = vunpack.c.h.b16 %v313
      %v541 = vunpack.c.l.b16 %v314
      %v542 = vunpack.c.h.b16 %v314
      %v543 = vunpack.c.l.b16 %v315
      %v544 = vunpack.c.h.b16 %v315
      %v545 = vunpack.c.l.b16 %v316
      %v546 = vunpack.c.h.b16 %v316
      %v547 = vunpack.c.l.b16 %v317
      %v548 = vunpack.c.h.b16 %v317
      %v549 = vunpack.c.l.b16 %v318
      %v550 = vunpack.c.h.b16 %v318
      %v551 = vunpack.c.l.b16 %v319
      %v552 = vunpack.c.h.b16 %v319
      %v553 = vunpack.c.l.b16 %v320
      %v554 = vunpack.c.h.b16 %v320
      %v555 = vunpack.c.l.b16 %v321
      %v556 = vunpack.c.h.b16 %v321
      %v557 = vunpack.c.l.b16 %v322
      %v558 = vunpack.c.h.b16 %v322
      %v559 = vunpack.c.l.b16 %v323
      %v560 = vunpack.c.h.b16 %v323
      %v561 = vunpack.c.l.b16 %v324
      %v562 = vunpack.c.h.b16 %v324
      %v563 = vunpack.c.l.b16 %v325
      %v564 = vunpack.c.h.b16 %v325
      %v565 = vunpack.c.l.b16 %v326
      %v566 = vunpack.c.h.b16 %v326
      %v567 = vunpack.c.l.b16 %v327
      %v568 = vunpack.c.h.b16 %v327
      %v569 = vunpack.c.l.b16 %v328
      %v570 = vunpack.c.h.b16 %v328
      %v571 = vunpack.c.l.b16 %v329
      %v572 = vunpack.c.h.b16 %v329
      %v573 = vunpack.c.l.b16 %v330
      %v574 = vunpack.c.h.b16 %v330
      %v575 = vunpack.c.l.b16 %v331
      %v576 = vunpack.c.h.b16 %v331
      %v577 = vunpack.c.l.b16 %v332
      %v578 = vunpack.c.h.b16 %v332
      %v579 = vunpack.c.l.b16 %v333
      %v580 = vunpack.c.h.b16 %v333
      %v581 = vunpack.c.l.b16 %v334
      %v582 = vunpack.c.h.b16 %v334
      %v583 = vunpack.c.l.b16 %v335
      %v584 = vunpack.c.h.b16 %v335
      %v585 = vunpack.c.l.b16 %v336
      %v586 = vunpack.c.h.b16 %v336
      %v587 = vunpack.c.l.b16 %v337
      %v588 = vunpack.c.h.b16 %v337
      %v589 = vunpack.c.l.b16 %v338
      %v590 = vunpack.c.h.b16 %v338
      %v591 = vunpack.c.l.b16 %v339
      %v592 = vunpack.c.h.b16 %v339
      %v593 = vunpack.c.l.b16 %v340
      %v594 = vunpack.c.h.b16 %v340
      %v595 = vunpack.c.l.b16 %v341
      %v596 = vunpack.c.h.b16 %v341
      %v597 = vunpack.c.l.b16 %v342
      %v598 = vunpack.c.h.b16 %v342
      %v599 = vunpack.c.l.b16 %v343
      %v600 = vunpack.c.h.b16 %v343
      %v601 = vunpack.c.l.b16 %v344
      %v602 = vunpack.c.h.b16 %v344
      %v603 = vunpack.c.l.b16 %v345
      %v604 = vunpack.c.h.b16 %v345
      %v605 = vunpack.c.l.b16 %v346
      %v606 = vunpack.c.h.b16 %v346
      %v607 = vunpack.c.l.b16 %v347
      %v608 = vunpack.c.h.b16 %v347
      %v609 = vunpack.c.l.b16 %v348
      %v610 = vunpack.c.h.b16 %v348
      %v611 = vpack.c.b16 %v487, %v483
      %v612 = vpack.c.b16 %v488, %v484
      %v613 = vpack.c.b16 %v489, %v485
      %v614 = vpack.c.b16 %v490, %v486
      %v615 = vpack.c.b16 %v495, %v491
      %v616 = vpack.c.b16 %v496, %v492
      %v617 = vpack.c.b16 %v497, %v493
      %v618 = vpack.c.b16 %v498, %v494
      %v619 = vpack.c.b16 %v503, %v499
      %v620 = vpack.c.b16 %v504, %v500
      %v621 = vpack.c.b16 %v505, %v501
      %v622 = vpack.c.b16 %v506, %v502
      %v623 = vpack.c.b16 %v511, %v507
      %v624 = vpack.c.b16 %v512, %v508
      %v625 = vpack.c.b16 %v513, %v509
      %v626 = vpack.c.b16 %v514, %v510
      %v627 = vpack.c.b16 %v519, %v515
      %v628 = vpack.c.b16 %v520, %v516
      %v629 = vpack.c.b16 %v521, %v517
      %v630 = vpack.c.b16 %v522, %v518
      %v631 = vpack.c.b16 %v527, %v523
      %v632 = vpack.c.b16 %v528, %v524
      %v633 = vpack.c.b16 %v529, %v525
      %v634 = vpack.c.b16 %v530, %v526
      %v635 = vpack.c.b16 %v535, %v531
      %v636 = vpack.c.b16 %v536, %v532
      %v637 = vpack.c.b16 %v537, %v533
      %v638 = vpack.c.b16 %v538, %v534
      %v639 = vpack.c.b16 %v543, %v539
      %v640 = vpack.c.b16 %v544, %v540
      %v641 = vpack.c.b16 %v545, %v541
      %v642 = vpack.c.b16 %v546, %v542
      %v643 = vpack.c.b16 %v551, %v547
      %v644 = vpack.c.b16 %v552, %v548
      %v645 = vpack.c.b16 %v553, %v549
      %v646 = vpack.c.b16 %v554, %v550
      %v647 = vpack.c.b16 %v559, %v555
      %v648 = vpack.c.b16 %v560, %v556
      %v649 = vpack.c.b16 %v561, %v557
      %v650 = vpack.c.b16 %v562, %v558
      %v651 = vpack.c.b16 %v567, %v563
      %v652 = vpack.c.b16 %v568, %v564
      %v653 = vpack.c.b16 %v569, %v565
      %v654 = vpack.c.b16 %v570, %v566
      %v655 = vpack.c.b16 %v575, %v571
      %v656 = vpack.c.b16 %v576, %v572
      %v657 = vpack.c.b16 %v577, %v573
      %v658 = vpack.c.b16 %v578, %v574
      %v659 = vpack.c.b16 %v583, %v579
      %v660 = vpack.c.b16 %v584, %v580
      %v661 = vpack.c.b16 %v585, %v581
      %v662 = vpack.c.b16 %v586, %v582
      %v663 = vpack.c.b16 %v591, %v587
      %v664 = vpack.c.b16 %v592, %v588
      %v665 = vpack.c.b16 %v593, %v589
      %v666 = vpack.c.b16 %v594, %v590
      %v667 = vpack.c.b16 %v599, %v595
      %v668 = vpack.c.b16 %v600, %v596
      %v669 = vpack.c.b16 %v601, %v597
      %v670 = vpack.c.b16 %v602, %v598
      %v671 = vpack.c.b16 %v607, %v603
      %v672 = vpack.c.b16 %v608, %v604
      %v673 = vpack.c.b16 %v609, %v605
      %v674 = vpack.c.b16 %v610, %v606
      %v803 = vunpack.c.l.b16 %v349
      %v804 = vunpack.c.h.b16 %v349
      %v805 = vunpack.c.l.b16 %v350
      %v806 = vunpack.c.h.b16 %v350
      %v807 = vunpack.c.l.b16 %v351
      %v808 = vunpack.c.h.b16 %v351
      %v809 = vunpack.c.l.b16 %v352
      %v810 = vunpack.c.h.b16 %v352
      %v811 = vunpack.c.l.b16 %v353
      %v812 = vunpack.c.h.b16 %v353
      %v813 = vunpack.c.l.b16 %v354
      %v814 = vunpack.c.h.b16 %v354
      %v815 = vunpack.c.l.b16 %v355
      %v816 = vunpack.c.h.b16 %v355
      %v817 = vunpack.c.l.b16 %v356
      %v818 = vunpack.c.h.b16 %v356
      %v819 = vunpack.c.l.b16 %v357
      %v820 = vunpack.c.h.b16 %v357
      %v821 = vunpack.c.l.b16 %v358
      %v822 = vunpack.c.h.b16 %v358
      %v823 = vunpack.c.l.b16 %v359
      %v824 = vunpack.c.h.b16 %v359
      %v825 = vunpack.c.l.b16 %v360
      %v826 = vunpack.c.h.b16 %v360
      %v827 = vunpack.c.l.b16 %v361
      %v828 = vunpack.c.h.b16 %v361
      %v829 = vunpack.c.l.b16 %v362
      %v830 = vunpack.c.h.b16 %v362
      %v831 = vunpack.c.l.b16 %v363
      %v832 = vunpack.c.h.b16 %v363
      %v833 = vunpack.c.l.b16 %v364
      %v834 = vunpack.c.h.b16 %v364
      %v835 = vunpack.c.l.b16 %v365
      %v836 = vunpack.c.h.b16 %v365
      %v837 = vunpack.c.l.b16 %v366
      %v838 = vunpack.c.h.b16 %v366
      %v839 = vunpack.c.l.b16 %v367
      %v840 = vunpack.c.h.b16 %v367
      %v841 = vunpack.c.l.b16 %v368
      %v842 = vunpack.c.h.b16 %v368
      %v843 = vunpack.c.l.b16 %v369
      %v844 = vunpack.c.h.b16 %v369
      %v845 = vunpack.c.l.b16 %v370
      %v846 = vunpack.c.h.b16 %v370
      %v847 = vunpack.c.l.b16 %v371
      %v848 = vunpack.c.h.b16 %v371
      %v849 = vunpack.c.l.b16 %v372
      %v850 = vunpack.c.h.b16 %v372
      %v851 = vunpack.c.l.b16 %v373
      %v852 = vunpack.c.h.b16 %v373
      %v853 = vunpack.c.l.b16 %v374
      %v854 = vunpack.c.h.b16 %v374
      %v855 = vunpack.c.l.b16 %v375
      %v856 = vunpack.c.h.b16 %v375
      %v857 = vunpack.c.l.b16 %v376
      %v858 = vunpack.c.h.b16 %v376
      %v859 = vunpack.c.l.b16 %v377
      %v860 = vunpack.c.h.b16 %v377
      %v861 = vunpack.c.l.b16 %v378
      %v862 = vunpack.c.h.b16 %v378
      %v863 = vunpack.c.l.b16 %v379
      %v864 = vunpack.c.h.b16 %v379
      %v865 = vunpack.c.l.b16 %v380
      %v866 = vunpack.c.h.b16 %v380
      %v867 = vunpack.c.l.b16 %v381
      %v868 = vunpack.c.h.b16 %v381
      %v869 = vunpack.c.l.b16 %v382
      %v870 = vunpack.c.h.b16 %v382
      %v871 = vunpack.c.l.b16 %v383
      %v872 = vunpack.c.h.b16 %v383
      %v873 = vunpack.c.l.b16 %v384
      %v874 = vunpack.c.h.b16 %v384
      %v875 = vunpack.c.l.b16 %v385
      %v876 = vunpack.c.h.b16 %v385
      %v877 = vunpack.c.l.b16 %v386
      %v878 = vunpack.c.h.b16 %v386
      %v879 = vunpack.c.l.b16 %v387
      %v880 = vunpack.c.h.b16 %v387
      %v881 = vunpack.c.l.b16 %v388
      %v882 = vunpack.c.h.b16 %v388
      %v883 = vunpack.c.l.b16 %v389
      %v884 = vunpack.c.h.b16 %v389
      %v885 = vunpack.c.l.b16 %v390
      %v886 = vunpack.c.h.b16 %v390
      %v887 = vunpack.c.l.b16 %v391
      %v888 = vunpack.c.h.b16 %v391
      %v889 = vunpack.c.l.b16 %v392
      %v890 = vunpack.c.h.b16 %v392
      %v891 = vunpack.c.l.b16 %v393
      %v892 = vunpack.c.h.b16 %v393
      %v893 = vunpack.c.l.b16 %v394
      %v894 = vunpack.c.h.b16 %v394
      %v895 = vunpack.c.l.b16 %v395
      %v896 = vunpack.c.h.b16 %v395
      %v897 = vunpack.c.l.b16 %v396
      %v898 = vunpack.c.h.b16 %v396
      %v899 = vunpack.c.l.b16 %v397
      %v900 = vunpack.c.h.b16 %v397
      %v901 = vunpack.c.l.b16 %v398
      %v902 = vunpack.c.h.b16 %v398
      %v903 = vunpack.c.l.b16 %v399
      %v904 = vunpack.c.h.b16 %v399
      %v905 = vunpack.c.l.b16 %v400
      %v906 = vunpack.c.h.b16 %v400
      %v907 = vunpack.c.l.b16 %v401
      %v908 = vunpack.c.h.b16 %v401
      %v909 = vunpack.c.l.b16 %v402
      %v910 = vunpack.c.h.b16 %v402
      %v911 = vunpack.c.l.b16 %v403
      %v912 = vunpack.c.h.b16 %v403
      %v913 = vunpack.c.l.b16 %v404
      %v914 = vunpack.c.h.b16 %v404
      %v915 = vunpack.c.l.b16 %v405
      %v916 = vunpack.c.h.b16 %v405
      %v917 = vunpack.c.l.b16 %v406
      %v918 = vunpack.c.h.b16 %v406
      %v919 = vunpack.c.l.b16 %v407
      %v920 = vunpack.c.h.b16 %v407
      %v921 = vunpack.c.l.b16 %v408
      %v922 = vunpack.c.h.b16 %v408
      %v923 = vunpack.c.l.b16 %v409
      %v924 = vunpack.c.h.b16 %v409
      %v925 = vunpack.c.l.b16 %v410
      %v926 = vunpack.c.h.b16 %v410
      %v927 = vunpack.c.l.b16 %v411
      %v928 = vunpack.c.h.b16 %v411
      %v929 = vunpack.c.l.b16 %v412
      %v930 = vunpack.c.h.b16 %v412
      %v931 = vpack.c.b16 %v805, %v803
      %v932 = vpack.c.b16 %v806, %v804
      %v933 = vpack.c.b16 %v809, %v807
      %v934 = vpack.c.b16 %v810, %v808
      %v935 = vpack.c.b16 %v813, %v811
      %v936 = vpack.c.b16 %v814, %v812
      %v937 = vpack.c.b16 %v817, %v815
      %v938 = vpack.c.b16 %v818, %v816
      %v939 = vpack.c.b16 %v821, %v819
      %v940 = vpack.c.b16 %v822, %v820
      %v941 = vpack.c.b16 %v825, %v823
      %v942 = vpack.c.b16 %v826, %v824
      %v943 = vpack.c.b16 %v829, %v827
      %v944 = vpack.c.b16 %v830, %v828
      %v945 = vpack.c.b16 %v833, %v831
      %v946 = vpack.c.b16 %v834, %v832
      %v947 = vpack.c.b16 %v837, %v835
      %v948 = vpack.c.b16 %v838, %v836
      %v949 = vpack.c.b16 %v841, %v839
      %v950 = vpack.c.b16 %v842, %v840
      %v951 = vpack.c.b16 %v845, %v843
      %v952 = vpack.c.b16 %v846, %v844
      %v953 = vpack.c.b16 %v849, %v847
      %v954 = vpack.c.b16 %v850, %v848
      %v955 = vpack.c.b16 %v853, %v851
      %v956 = vpack.c.b16 %v854, %v852
      %v957 = vpack.c.b16 %v857, %v855
      %v958 = vpack.c.b16 %v858, %v856
      %v959 = vpack.c.b16 %v861, %v859
      %v960 = vpack.c.b16 %v862, %v860
      %v961 = vpack.c.b16 %v865, %v863
      %v962 = vpack.c.b16 %v866, %v864
      %v963 = vpack.c.b16 %v869, %v867
      %v964 = vpack.c.b16 %v870, %v868
      %v965 = vpack.c.b16 %v873, %v871
      %v966 = vpack.c.b16 %v874, %v872
      %v967 = vpack.c.b16 %v877, %v875
      %v968 = vpack.c.b16 %v878, %v876
      %v969 = vpack.c.b16 %v881, %v879
      %v970 = vpack.c.b16 %v882, %v880
      %v971 = vpack.c.b16 %v885, %v883
      %v972 = vpack.c.b16 %v886, %v884
      %v973 = vpack.c.b16 %v889, %v887
      %v974 = vpack.c.b16 %v890, %v888
      %v975 = vpack.c.b16 %v893, %v891
      %v976 = vpack.c.b16 %v894, %v892
      %v977 = vpack.c.b16 %v897, %v895
      %v978 = vpack.c.b16 %v898, %v896
      %v979 = vpack.c.b16 %v901, %v899
      %v980 = vpack.c.b16 %v902, %v900
      %v981 = vpack.c.b16 %v905, %v903
      %v982 = vpack.c.b16 %v906, %v904
      %v983 = vpack.c.b16 %v909, %v907
      %v984 = vpack.c.b16 %v910, %v908
      %v985 = vpack.c.b16 %v913, %v911
      %v986 = vpack.c.b16 %v914, %v912
      %v987 = vpack.c.b16 %v917, %v915
      %v988 = vpack.c.b16 %v918, %v916
      %v989 = vpack.c.b16 %v921, %v919
      %v990 = vpack.c.b16 %v922, %v920
      %v991 = vpack.c.b16 %v925, %v923
      %v992 = vpack.c.b16 %v926, %v924
      %v993 = vpack.c.b16 %v929, %v927
      %v994 = vpack.c.b16 %v930, %v928
      %1059 = vmatpush.bf16.msra.mxu0 %v945
      %1060 = vmatpush.bf16.msra.mxu0 %v943
      %1061 = vmatpush.bf16.msra.mxu0 %v941
      %1062 = vmatpush.bf16.msra.mxu0 %v939
      %1063 = vmatpush.bf16.msra.mxu0 %v937
      %1064 = vmatpush.bf16.msra.mxu0 %v935
      %1065 = vmatpush.bf16.msra.mxu0 %v933
      %1066 = vmatpush.bf16.msra.mxu0 %v931
      %1067 = vmatmul.bf16.gmra.mxu0 %v611
      %v1068 = vpop.f32.mrf.mxu0
      %v1069 = vadd.f32 %v415, %v1068
      %v1070 = vpop.f32.mrf.mxu0
      %v1071 = vadd.f32 %v415, %v1070
      %1072 = vmatmul.bf16.gmra.mxu0 %v615
      %v1073 = vpop.f32.mrf.mxu0
      %v1074 = vadd.f32 %v415, %v1073
      %v1075 = vpop.f32.mrf.mxu0
      %v1076 = vadd.f32 %v415, %v1075
      %1077 = vmatmul.bf16.gmra.mxu0 %v619
      %v1078 = vpop.f32.mrf.mxu0
      %v1079 = vadd.f32 %v415, %v1078
      %v1080 = vpop.f32.mrf.mxu0
      %v1081 = vadd.f32 %v415, %v1080
      %1082 = vmatmul.bf16.gmra.mxu0 %v623
      %v1083 = vpop.f32.mrf.mxu0
      %v1084 = vadd.f32 %v415, %v1083
      %v1085 = vpop.f32.mrf.mxu0
      %v1086 = vadd.f32 %v415, %v1085
      %1087 = vmatmul.bf16.gmra.mxu0 %v627
      %v1088 = vpop.f32.mrf.mxu0
      %v1089 = vadd.f32 %v415, %v1088
      %v1090 = vpop.f32.mrf.mxu0
      %v1091 = vadd.f32 %v415, %v1090
      %1092 = vmatmul.bf16.gmra.mxu0 %v631
      %v1093 = vpop.f32.mrf.mxu0
      %v1094 = vadd.f32 %v415, %v1093
      %v1095 = vpop.f32.mrf.mxu0
      %v1096 = vadd.f32 %v415, %v1095
      %1097 = vmatmul.bf16.gmra.mxu0 %v635
      %v1098 = vpop.f32.mrf.mxu0
      %v1099 = vadd.f32 %v415, %v1098
      %v1100 = vpop.f32.mrf.mxu0
      %v1101 = vadd.f32 %v415, %v1100
      %1102 = vmatmul.bf16.gmra.mxu0 %v639
      %v1103 = vpop.f32.mrf.mxu0
      %v1104 = vadd.f32 %v415, %v1103
      %v1105 = vpop.f32.mrf.mxu0
      %v1106 = vadd.f32 %v415, %v1105
      %1107 = vmatmul.bf16.gmra.mxu0 %v643
      %v1108 = vpop.f32.mrf.mxu0
      %v1109 = vadd.f32 %v415, %v1108
      %v1110 = vpop.f32.mrf.mxu0
      %v1111 = vadd.f32 %v415, %v1110
      %1112 = vmatmul.bf16.gmra.mxu0 %v647
      %v1113 = vpop.f32.mrf.mxu0
      %v1114 = vadd.f32 %v415, %v1113
      %v1115 = vpop.f32.mrf.mxu0
      %v1116 = vadd.f32 %v415, %v1115
      %1117 = vmatmul.bf16.gmra.mxu0 %v651
      %v1118 = vpop.f32.mrf.mxu0
      %v1119 = vadd.f32 %v415, %v1118
      %v1120 = vpop.f32.mrf.mxu0
      %v1121 = vadd.f32 %v415, %v1120
      %1122 = vmatmul.bf16.gmra.mxu0 %v655
      %v1123 = vpop.f32.mrf.mxu0
      %v1124 = vadd.f32 %v415, %v1123
      %v1125 = vpop.f32.mrf.mxu0
      %v1126 = vadd.f32 %v415, %v1125
      %1127 = vmatmul.bf16.gmra.mxu0 %v659
      %v1128 = vpop.f32.mrf.mxu0
      %v1129 = vadd.f32 %v415, %v1128
      %v1130 = vpop.f32.mrf.mxu0
      %v1131 = vadd.f32 %v415, %v1130
      %1132 = vmatmul.bf16.gmra.mxu0 %v663
      %v1133 = vpop.f32.mrf.mxu0
      %v1134 = vadd.f32 %v415, %v1133
      %v1135 = vpop.f32.mrf.mxu0
      %v1136 = vadd.f32 %v415, %v1135
      %1137 = vmatmul.bf16.gmra.mxu0 %v667
      %v1138 = vpop.f32.mrf.mxu0
      %v1139 = vadd.f32 %v415, %v1138
      %v1140 = vpop.f32.mrf.mxu0
      %v1141 = vadd.f32 %v415, %v1140
      %1142 = vmatmul.bf16.gmra.mxu0 %v671
      %v1143 = vpop.f32.mrf.mxu0
      %v1144 = vadd.f32 %v415, %v1143
      %v1145 = vpop.f32.mrf.mxu0
      %v1146 = vadd.f32 %v415, %v1145
      %1147 = vdwg.mxu0
      %1148 = vmatpush.bf16.msra.mxu0 %v961
      %1149 = vmatpush.bf16.msra.mxu0 %v959
      %1150 = vmatpush.bf16.msra.mxu0 %v957
      %1151 = vmatpush.bf16.msra.mxu0 %v955
      %1152 = vmatpush.bf16.msra.mxu0 %v953
      %1153 = vmatpush.bf16.msra.mxu0 %v951
      %1154 = vmatpush.bf16.msra.mxu0 %v949
      %1155 = vmatpush.bf16.msra.mxu0 %v947
      %1156 = vmatmul.bf16.gmra.mxu0 %v612
      %v1157 = vpop.f32.mrf.mxu0
      %v1158 = vadd.f32 %v1069, %v1157
      %v1159 = vpop.f32.mrf.mxu0
      %v1160 = vadd.f32 %v1071, %v1159
      %1161 = vmatmul.bf16.gmra.mxu0 %v616
      %v1162 = vpop.f32.mrf.mxu0
      %v1163 = vadd.f32 %v1074, %v1162
      %v1164 = vpop.f32.mrf.mxu0
      %v1165 = vadd.f32 %v1076, %v1164
      %1166 = vmatmul.bf16.gmra.mxu0 %v620
      %v1167 = vpop.f32.mrf.mxu0
      %v1168 = vadd.f32 %v1079, %v1167
      %v1169 = vpop.f32.mrf.mxu0
      %v1170 = vadd.f32 %v1081, %v1169
      %1171 = vmatmul.bf16.gmra.mxu0 %v624
      %v1172 = vpop.f32.mrf.mxu0
      %v1173 = vadd.f32 %v1084, %v1172
      %v1174 = vpop.f32.mrf.mxu0
      %v1175 = vadd.f32 %v1086, %v1174
      %1176 = vmatmul.bf16.gmra.mxu0 %v628
      %v1177 = vpop.f32.mrf.mxu0
      %v1178 = vadd.f32 %v1089, %v1177
      %v1179 = vpop.f32.mrf.mxu0
      %v1180 = vadd.f32 %v1091, %v1179
      %1181 = vmatmul.bf16.gmra.mxu0 %v632
      %v1182 = vpop.f32.mrf.mxu0
      %v1183 = vadd.f32 %v1094, %v1182
      %v1184 = vpop.f32.mrf.mxu0
      %v1185 = vadd.f32 %v1096, %v1184
      %1186 = vmatmul.bf16.gmra.mxu0 %v636
      %v1187 = vpop.f32.mrf.mxu0
      %v1188 = vadd.f32 %v1099, %v1187
      %v1189 = vpop.f32.mrf.mxu0
      %v1190 = vadd.f32 %v1101, %v1189
      %1191 = vmatmul.bf16.gmra.mxu0 %v640
      %v1192 = vpop.f32.mrf.mxu0
      %v1193 = vadd.f32 %v1104, %v1192
      %v1194 = vpop.f32.mrf.mxu0
      %v1195 = vadd.f32 %v1106, %v1194
      %1196 = vmatmul.bf16.gmra.mxu0 %v644
      %v1197 = vpop.f32.mrf.mxu0
      %v1198 = vadd.f32 %v1109, %v1197
      %v1199 = vpop.f32.mrf.mxu0
      %v1200 = vadd.f32 %v1111, %v1199
      %1201 = vmatmul.bf16.gmra.mxu0 %v648
      %v1202 = vpop.f32.mrf.mxu0
      %v1203 = vadd.f32 %v1114, %v1202
      %v1204 = vpop.f32.mrf.mxu0
      %v1205 = vadd.f32 %v1116, %v1204
      %1206 = vmatmul.bf16.gmra.mxu0 %v652
      %v1207 = vpop.f32.mrf.mxu0
      %v1208 = vadd.f32 %v1119, %v1207
      %v1209 = vpop.f32.mrf.mxu0
      %v1210 = vadd.f32 %v1121, %v1209
      %1211 = vmatmul.bf16.gmra.mxu0 %v656
      %v1212 = vpop.f32.mrf.mxu0
      %v1213 = vadd.f32 %v1124, %v1212
      %v1214 = vpop.f32.mrf.mxu0
      %v1215 = vadd.f32 %v1126, %v1214
      %1216 = vmatmul.bf16.gmra.mxu0 %v660
      %v1217 = vpop.f32.mrf.mxu0
      %v1218 = vadd.f32 %v1129, %v1217
      %v1219 = vpop.f32.mrf.mxu0
      %v1220 = vadd.f32 %v1131, %v1219
      %1221 = vmatmul.bf16.gmra.mxu0 %v664
      %v1222 = vpop.f32.mrf.mxu0
      %v1223 = vadd.f32 %v1134, %v1222
      %v1224 = vpop.f32.mrf.mxu0
      %v1225 = vadd.f32 %v1136, %v1224
      %1226 = vmatmul.bf16.gmra.mxu0 %v668
      %v1227 = vpop.f32.mrf.mxu0
      %v1228 = vadd.f32 %v1139, %v1227
      %v1229 = vpop.f32.mrf.mxu0
      %v1230 = vadd.f32 %v1141, %v1229
      %1231 = vmatmul.bf16.gmra.mxu0 %v672
      %v1232 = vpop.f32.mrf.mxu0
      %v1233 = vadd.f32 %v1144, %v1232
      %v1234 = vpop.f32.mrf.mxu0
      %v1235 = vadd.f32 %v1146, %v1234
      %1236 = vdwg.mxu0
      %1237 = vmatpush.bf16.msra.mxu0 %v977
      %1238 = vmatpush.bf16.msra.mxu0 %v975
      %1239 = vmatpush.bf16.msra.mxu0 %v973
      %1240 = vmatpush.bf16.msra.mxu0 %v971
      %1241 = vmatpush.bf16.msra.mxu0 %v969
      %1242 = vmatpush.bf16.msra.mxu0 %v967
      %1243 = vmatpush.bf16.msra.mxu0 %v965
      %1244 = vmatpush.bf16.msra.mxu0 %v963
      %1245 = vmatmul.bf16.gmra.mxu0 %v613
      %v1246 = vpop.f32.mrf.mxu0
      %v1247 = vadd.f32 %v1158, %v1246
      %v1248 = vpop.f32.mrf.mxu0
      %v1249 = vadd.f32 %v1160, %v1248
      %1250 = vmatmul.bf16.gmra.mxu0 %v617
      %v1251 = vpop.f32.mrf.mxu0
      %v1252 = vadd.f32 %v1163, %v1251
      %v1253 = vpop.f32.mrf.mxu0
      %v1254 = vadd.f32 %v1165, %v1253
      %1255 = vmatmul.bf16.gmra.mxu0 %v621
      %v1256 = vpop.f32.mrf.mxu0
      %v1257 = vadd.f32 %v1168, %v1256
      %v1258 = vpop.f32.mrf.mxu0
      %v1259 = vadd.f32 %v1170, %v1258
      %1260 = vmatmul.bf16.gmra.mxu0 %v625
      %v1261 = vpop.f32.mrf.mxu0
      %v1262 = vadd.f32 %v1173, %v1261
      %v1263 = vpop.f32.mrf.mxu0
      %v1264 = vadd.f32 %v1175, %v1263
      %1265 = vmatmul.bf16.gmra.mxu0 %v629
      %v1266 = vpop.f32.mrf.mxu0
      %v1267 = vadd.f32 %v1178, %v1266
      %v1268 = vpop.f32.mrf.mxu0
      %v1269 = vadd.f32 %v1180, %v1268
      %1270 = vmatmul.bf16.gmra.mxu0 %v633
      %v1271 = vpop.f32.mrf.mxu0
      %v1272 = vadd.f32 %v1183, %v1271
      %v1273 = vpop.f32.mrf.mxu0
      %v1274 = vadd.f32 %v1185, %v1273
      %1275 = vmatmul.bf16.gmra.mxu0 %v637
      %v1276 = vpop.f32.mrf.mxu0
      %v1277 = vadd.f32 %v1188, %v1276
      %v1278 = vpop.f32.mrf.mxu0
      %v1279 = vadd.f32 %v1190, %v1278
      %1280 = vmatmul.bf16.gmra.mxu0 %v641
      %v1281 = vpop.f32.mrf.mxu0
      %v1282 = vadd.f32 %v1193, %v1281
      %v1283 = vpop.f32.mrf.mxu0
      %v1284 = vadd.f32 %v1195, %v1283
      %1285 = vmatmul.bf16.gmra.mxu0 %v645
      %v1286 = vpop.f32.mrf.mxu0
      %v1287 = vadd.f32 %v1198, %v1286
      %v1288 = vpop.f32.mrf.mxu0
      %v1289 = vadd.f32 %v1200, %v1288
      %1290 = vmatmul.bf16.gmra.mxu0 %v649
      %v1291 = vpop.f32.mrf.mxu0
      %v1292 = vadd.f32 %v1203, %v1291
      %v1293 = vpop.f32.mrf.mxu0
      %v1294 = vadd.f32 %v1205, %v1293
      %1295 = vmatmul.bf16.gmra.mxu0 %v653
      %v1296 = vpop.f32.mrf.mxu0
      %v1297 = vadd.f32 %v1208, %v1296
      %v1298 = vpop.f32.mrf.mxu0
      %v1299 = vadd.f32 %v1210, %v1298
      %1300 = vmatmul.bf16.gmra.mxu0 %v657
      %v1301 = vpop.f32.mrf.mxu0
      %v1302 = vadd.f32 %v1213, %v1301
      %v1303 = vpop.f32.mrf.mxu0
      %v1304 = vadd.f32 %v1215, %v1303
      %1305 = vmatmul.bf16.gmra.mxu0 %v661
      %v1306 = vpop.f32.mrf.mxu0
      %v1307 = vadd.f32 %v1218, %v1306
      %v1308 = vpop.f32.mrf.mxu0
      %v1309 = vadd.f32 %v1220, %v1308
      %1310 = vmatmul.bf16.gmra.mxu0 %v665
      %v1311 = vpop.f32.mrf.mxu0
      %v1312 = vadd.f32 %v1223, %v1311
      %v1313 = vpop.f32.mrf.mxu0
      %v1314 = vadd.f32 %v1225, %v1313
      %1315 = vmatmul.bf16.gmra.mxu0 %v669
      %v1316 = vpop.f32.mrf.mxu0
      %v1317 = vadd.f32 %v1228, %v1316
      %v1318 = vpop.f32.mrf.mxu0
      %v1319 = vadd.f32 %v1230, %v1318
      %1320 = vmatmul.bf16.gmra.mxu0 %v673
      %v1321 = vpop.f32.mrf.mxu0
      %v1322 = vadd.f32 %v1233, %v1321
      %v1323 = vpop.f32.mrf.mxu0
      %v1324 = vadd.f32 %v1235, %v1323
      %1325 = vdwg.mxu0
      %1326 = vmatpush.bf16.msra.mxu0 %v993
      %1327 = vmatpush.bf16.msra.mxu0 %v991
      %1328 = vmatpush.bf16.msra.mxu0 %v989
      %1329 = vmatpush.bf16.msra.mxu0 %v987
      %1330 = vmatpush.bf16.msra.mxu0 %v985
      %1331 = vmatpush.bf16.msra.mxu0 %v983
      %1332 = vmatpush.bf16.msra.mxu0 %v981
      %1333 = vmatpush.bf16.msra.mxu0 %v979
      %1334 = vmatmul.bf16.gmra.mxu0 %v614
      %v1335 = vpop.f32.mrf.mxu0
      %v1336 = vadd.f32 %v1247, %v1335
      %v1337 = vpop.f32.mrf.mxu0
      %v1338 = vadd.f32 %v1249, %v1337
      %1339 = vmatmul.bf16.gmra.mxu0 %v618
      %v1340 = vpop.f32.mrf.mxu0
      %v1341 = vadd.f32 %v1252, %v1340
      %v1342 = vpop.f32.mrf.mxu0
      %v1343 = vadd.f32 %v1254, %v1342
      %1344 = vmatmul.bf16.gmra.mxu0 %v622
      %v1345 = vpop.f32.mrf.mxu0
      %v1346 = vadd.f32 %v1257, %v1345
      %v1347 = vpop.f32.mrf.mxu0
      %v1348 = vadd.f32 %v1259, %v1347
      %1349 = vmatmul.bf16.gmra.mxu0 %v626
      %v1350 = vpop.f32.mrf.mxu0
      %v1351 = vadd.f32 %v1262, %v1350
      %v1352 = vpop.f32.mrf.mxu0
      %v1353 = vadd.f32 %v1264, %v1352
      %1354 = vmatmul.bf16.gmra.mxu0 %v630
      %v1355 = vpop.f32.mrf.mxu0
      %v1356 = vadd.f32 %v1267, %v1355
      %v1357 = vpop.f32.mrf.mxu0
      %v1358 = vadd.f32 %v1269, %v1357
      %1359 = vmatmul.bf16.gmra.mxu0 %v634
      %v1360 = vpop.f32.mrf.mxu0
      %v1361 = vadd.f32 %v1272, %v1360
      %v1362 = vpop.f32.mrf.mxu0
      %v1363 = vadd.f32 %v1274, %v1362
      %1364 = vmatmul.bf16.gmra.mxu0 %v638
      %v1365 = vpop.f32.mrf.mxu0
      %v1366 = vadd.f32 %v1277, %v1365
      %v1367 = vpop.f32.mrf.mxu0
      %v1368 = vadd.f32 %v1279, %v1367
      %1369 = vmatmul.bf16.gmra.mxu0 %v642
      %v1370 = vpop.f32.mrf.mxu0
      %v1371 = vadd.f32 %v1282, %v1370
      %v1372 = vpop.f32.mrf.mxu0
      %v1373 = vadd.f32 %v1284, %v1372
      %1374 = vmatmul.bf16.gmra.mxu0 %v646
      %v1375 = vpop.f32.mrf.mxu0
      %v1376 = vadd.f32 %v1287, %v1375
      %v1377 = vpop.f32.mrf.mxu0
      %v1378 = vadd.f32 %v1289, %v1377
      %1379 = vmatmul.bf16.gmra.mxu0 %v650
      %v1380 = vpop.f32.mrf.mxu0
      %v1381 = vadd.f32 %v1292, %v1380
      %v1382 = vpop.f32.mrf.mxu0
      %v1383 = vadd.f32 %v1294, %v1382
      %1384 = vmatmul.bf16.gmra.mxu0 %v654
      %v1385 = vpop.f32.mrf.mxu0
      %v1386 = vadd.f32 %v1297, %v1385
      %v1387 = vpop.f32.mrf.mxu0
      %v1388 = vadd.f32 %v1299, %v1387
      %1389 = vmatmul.bf16.gmra.mxu0 %v658
      %v1390 = vpop.f32.mrf.mxu0
      %v1391 = vadd.f32 %v1302, %v1390
      %v1392 = vpop.f32.mrf.mxu0
      %v1393 = vadd.f32 %v1304, %v1392
      %1394 = vmatmul.bf16.gmra.mxu0 %v662
      %v1395 = vpop.f32.mrf.mxu0
      %v1396 = vadd.f32 %v1307, %v1395
      %v1397 = vpop.f32.mrf.mxu0
      %v1398 = vadd.f32 %v1309, %v1397
      %1399 = vmatmul.bf16.gmra.mxu0 %v666
      %v1400 = vpop.f32.mrf.mxu0
      %v1401 = vadd.f32 %v1312, %v1400
      %v1402 = vpop.f32.mrf.mxu0
      %v1403 = vadd.f32 %v1314, %v1402
      %1404 = vmatmul.bf16.gmra.mxu0 %v670
      %v1405 = vpop.f32.mrf.mxu0
      %v1406 = vadd.f32 %v1317, %v1405
      %v1407 = vpop.f32.mrf.mxu0
      %v1408 = vadd.f32 %v1319, %v1407
      %1409 = vmatmul.bf16.gmra.mxu0 %v674
      %v1410 = vpop.f32.mrf.mxu0
      %v1411 = vadd.f32 %v1322, %v1410
      %v1412 = vpop.f32.mrf.mxu0
      %v1413 = vadd.f32 %v1324, %v1412
      %1414 = vdwg.mxu0
      %1415 = vmatpush.bf16.msra.mxu0 %v946
      %1416 = vmatpush.bf16.msra.mxu0 %v944
      %1417 = vmatpush.bf16.msra.mxu0 %v942
      %1418 = vmatpush.bf16.msra.mxu0 %v940
      %1419 = vmatpush.bf16.msra.mxu0 %v938
      %1420 = vmatpush.bf16.msra.mxu0 %v936
      %1421 = vmatpush.bf16.msra.mxu0 %v934
      %1422 = vmatpush.bf16.msra.mxu0 %v932
      %1423 = vmatmul.bf16.gmra.mxu0 %v611
      %v1424 = vpop.f32.mrf.mxu0
      %v1425 = vadd.f32 %v416, %v1424
      %v1426 = vpop.f32.mrf.mxu0
      %v1427 = vadd.f32 %v416, %v1426
      %1428 = vmatmul.bf16.gmra.mxu0 %v615
      %v1429 = vpop.f32.mrf.mxu0
      %v1430 = vadd.f32 %v416, %v1429
      %v1431 = vpop.f32.mrf.mxu0
      %v1432 = vadd.f32 %v416, %v1431
      %1433 = vmatmul.bf16.gmra.mxu0 %v619
      %v1434 = vpop.f32.mrf.mxu0
      %v1435 = vadd.f32 %v416, %v1434
      %v1436 = vpop.f32.mrf.mxu0
      %v1437 = vadd.f32 %v416, %v1436
      %1438 = vmatmul.bf16.gmra.mxu0 %v623
      %v1439 = vpop.f32.mrf.mxu0
      %v1440 = vadd.f32 %v416, %v1439
      %v1441 = vpop.f32.mrf.mxu0
      %v1442 = vadd.f32 %v416, %v1441
      %1443 = vmatmul.bf16.gmra.mxu0 %v627
      %v1444 = vpop.f32.mrf.mxu0
      %v1445 = vadd.f32 %v416, %v1444
      %v1446 = vpop.f32.mrf.mxu0
      %v1447 = vadd.f32 %v416, %v1446
      %1448 = vmatmul.bf16.gmra.mxu0 %v631
      %v1449 = vpop.f32.mrf.mxu0
      %v1450 = vadd.f32 %v416, %v1449
      %v1451 = vpop.f32.mrf.mxu0
      %v1452 = vadd.f32 %v416, %v1451
      %1453 = vmatmul.bf16.gmra.mxu0 %v635
      %v1454 = vpop.f32.mrf.mxu0
      %v1455 = vadd.f32 %v416, %v1454
      %v1456 = vpop.f32.mrf.mxu0
      %v1457 = vadd.f32 %v416, %v1456
      %1458 = vmatmul.bf16.gmra.mxu0 %v639
      %v1459 = vpop.f32.mrf.mxu0
      %v1460 = vadd.f32 %v416, %v1459
      %v1461 = vpop.f32.mrf.mxu0
      %v1462 = vadd.f32 %v416, %v1461
      %1463 = vmatmul.bf16.gmra.mxu0 %v643
      %v1464 = vpop.f32.mrf.mxu0
      %v1465 = vadd.f32 %v416, %v1464
      %v1466 = vpop.f32.mrf.mxu0
      %v1467 = vadd.f32 %v416, %v1466
      %1468 = vmatmul.bf16.gmra.mxu0 %v647
      %v1469 = vpop.f32.mrf.mxu0
      %v1470 = vadd.f32 %v416, %v1469
      %v1471 = vpop.f32.mrf.mxu0
      %v1472 = vadd.f32 %v416, %v1471
      %1473 = vmatmul.bf16.gmra.mxu0 %v651
      %v1474 = vpop.f32.mrf.mxu0
      %v1475 = vadd.f32 %v416, %v1474
      %v1476 = vpop.f32.mrf.mxu0
      %v1477 = vadd.f32 %v416, %v1476
      %1478 = vmatmul.bf16.gmra.mxu0 %v655
      %v1479 = vpop.f32.mrf.mxu0
      %v1480 = vadd.f32 %v416, %v1479
      %v1481 = vpop.f32.mrf.mxu0
      %v1482 = vadd.f32 %v416, %v1481
      %1483 = vmatmul.bf16.gmra.mxu0 %v659
      %v1484 = vpop.f32.mrf.mxu0
      %v1485 = vadd.f32 %v416, %v1484
      %v1486 = vpop.f32.mrf.mxu0
      %v1487 = vadd.f32 %v416, %v1486
      %1488 = vmatmul.bf16.gmra.mxu0 %v663
      %v1489 = vpop.f32.mrf.mxu0
      %v1490 = vadd.f32 %v416, %v1489
      %v1491 = vpop.f32.mrf.mxu0
      %v1492 = vadd.f32 %v416, %v1491
      %1493 = vmatmul.bf16.gmra.mxu0 %v667
      %v1494 = vpop.f32.mrf.mxu0
      %v1495 = vadd.f32 %v416, %v1494
      %v1496 = vpop.f32.mrf.mxu0
      %v1497 = vadd.f32 %v416, %v1496
      %1498 = vmatmul.bf16.gmra.mxu0 %v671
      %v1499 = vpop.f32.mrf.mxu0
      %v1500 = vadd.f32 %v416, %v1499
      %v1501 = vpop.f32.mrf.mxu0
      %v1502 = vadd.f32 %v416, %v1501
      %1503 = vdwg.mxu0
      %1504 = vmatpush.bf16.msra.mxu0 %v962
      %1505 = vmatpush.bf16.msra.mxu0 %v960
      %1506 = vmatpush.bf16.msra.mxu0 %v958
      %1507 = vmatpush.bf16.msra.mxu0 %v956
      %1508 = vmatpush.bf16.msra.mxu0 %v954
      %1509 = vmatpush.bf16.msra.mxu0 %v952
      %1510 = vmatpush.bf16.msra.mxu0 %v950
      %1511 = vmatpush.bf16.msra.mxu0 %v948
      %1512 = vmatmul.bf16.gmra.mxu0 %v612
      %v1513 = vpop.f32.mrf.mxu0
      %v1514 = vadd.f32 %v1425, %v1513
      %v1515 = vpop.f32.mrf.mxu0
      %v1516 = vadd.f32 %v1427, %v1515
      %1517 = vmatmul.bf16.gmra.mxu0 %v616
      %v1518 = vpop.f32.mrf.mxu0
      %v1519 = vadd.f32 %v1430, %v1518
      %v1520 = vpop.f32.mrf.mxu0
      %v1521 = vadd.f32 %v1432, %v1520
      %1522 = vmatmul.bf16.gmra.mxu0 %v620
      %v1523 = vpop.f32.mrf.mxu0
      %v1524 = vadd.f32 %v1435, %v1523
      %v1525 = vpop.f32.mrf.mxu0
      %v1526 = vadd.f32 %v1437, %v1525
      %1527 = vmatmul.bf16.gmra.mxu0 %v624
      %v1528 = vpop.f32.mrf.mxu0
      %v1529 = vadd.f32 %v1440, %v1528
      %v1530 = vpop.f32.mrf.mxu0
      %v1531 = vadd.f32 %v1442, %v1530
      %1532 = vmatmul.bf16.gmra.mxu0 %v628
      %v1533 = vpop.f32.mrf.mxu0
      %v1534 = vadd.f32 %v1445, %v1533
      %v1535 = vpop.f32.mrf.mxu0
      %v1536 = vadd.f32 %v1447, %v1535
      %1537 = vmatmul.bf16.gmra.mxu0 %v632
      %v1538 = vpop.f32.mrf.mxu0
      %v1539 = vadd.f32 %v1450, %v1538
      %v1540 = vpop.f32.mrf.mxu0
      %v1541 = vadd.f32 %v1452, %v1540
      %1542 = vmatmul.bf16.gmra.mxu0 %v636
      %v1543 = vpop.f32.mrf.mxu0
      %v1544 = vadd.f32 %v1455, %v1543
      %v1545 = vpop.f32.mrf.mxu0
      %v1546 = vadd.f32 %v1457, %v1545
      %1547 = vmatmul.bf16.gmra.mxu0 %v640
      %v1548 = vpop.f32.mrf.mxu0
      %v1549 = vadd.f32 %v1460, %v1548
      %v1550 = vpop.f32.mrf.mxu0
      %v1551 = vadd.f32 %v1462, %v1550
      %1552 = vmatmul.bf16.gmra.mxu0 %v644
      %v1553 = vpop.f32.mrf.mxu0
      %v1554 = vadd.f32 %v1465, %v1553
      %v1555 = vpop.f32.mrf.mxu0
      %v1556 = vadd.f32 %v1467, %v1555
      %1557 = vmatmul.bf16.gmra.mxu0 %v648
      %v1558 = vpop.f32.mrf.mxu0
      %v1559 = vadd.f32 %v1470, %v1558
      %v1560 = vpop.f32.mrf.mxu0
      %v1561 = vadd.f32 %v1472, %v1560
      %1562 = vmatmul.bf16.gmra.mxu0 %v652
      %v1563 = vpop.f32.mrf.mxu0
      %v1564 = vadd.f32 %v1475, %v1563
      %v1565 = vpop.f32.mrf.mxu0
      %v1566 = vadd.f32 %v1477, %v1565
      %1567 = vmatmul.bf16.gmra.mxu0 %v656
      %v1568 = vpop.f32.mrf.mxu0
      %v1569 = vadd.f32 %v1480, %v1568
      %v1570 = vpop.f32.mrf.mxu0
      %v1571 = vadd.f32 %v1482, %v1570
      %1572 = vmatmul.bf16.gmra.mxu0 %v660
      %v1573 = vpop.f32.mrf.mxu0
      %v1574 = vadd.f32 %v1485, %v1573
      %v1575 = vpop.f32.mrf.mxu0
      %v1576 = vadd.f32 %v1487, %v1575
      %1577 = vmatmul.bf16.gmra.mxu0 %v664
      %v1578 = vpop.f32.mrf.mxu0
      %v1579 = vadd.f32 %v1490, %v1578
      %v1580 = vpop.f32.mrf.mxu0
      %v1581 = vadd.f32 %v1492, %v1580
      %1582 = vmatmul.bf16.gmra.mxu0 %v668
      %v1583 = vpop.f32.mrf.mxu0
      %v1584 = vadd.f32 %v1495, %v1583
      %v1585 = vpop.f32.mrf.mxu0
      %v1586 = vadd.f32 %v1497, %v1585
      %1587 = vmatmul.bf16.gmra.mxu0 %v672
      %v1588 = vpop.f32.mrf.mxu0
      %v1589 = vadd.f32 %v1500, %v1588
      %v1590 = vpop.f32.mrf.mxu0
      %v1591 = vadd.f32 %v1502, %v1590
      %1592 = vdwg.mxu0
      %1593 = vmatpush.bf16.msra.mxu0 %v978
      %1594 = vmatpush.bf16.msra.mxu0 %v976
      %1595 = vmatpush.bf16.msra.mxu0 %v974
      %1596 = vmatpush.bf16.msra.mxu0 %v972
      %1597 = vmatpush.bf16.msra.mxu0 %v970
      %1598 = vmatpush.bf16.msra.mxu0 %v968
      %1599 = vmatpush.bf16.msra.mxu0 %v966
      %1600 = vmatpush.bf16.msra.mxu0 %v964
      %1601 = vmatmul.bf16.gmra.mxu0 %v613
      %v1602 = vpop.f32.mrf.mxu0
      %v1603 = vadd.f32 %v1514, %v1602
      %v1604 = vpop.f32.mrf.mxu0
      %v1605 = vadd.f32 %v1516, %v1604
      %1606 = vmatmul.bf16.gmra.mxu0 %v617
      %v1607 = vpop.f32.mrf.mxu0
      %v1608 = vadd.f32 %v1519, %v1607
      %v1609 = vpop.f32.mrf.mxu0
      %v1610 = vadd.f32 %v1521, %v1609
      %1611 = vmatmul.bf16.gmra.mxu0 %v621
      %v1612 = vpop.f32.mrf.mxu0
      %v1613 = vadd.f32 %v1524, %v1612
      %v1614 = vpop.f32.mrf.mxu0
      %v1615 = vadd.f32 %v1526, %v1614
      %1616 = vmatmul.bf16.gmra.mxu0 %v625
      %v1617 = vpop.f32.mrf.mxu0
      %v1618 = vadd.f32 %v1529, %v1617
      %v1619 = vpop.f32.mrf.mxu0
      %v1620 = vadd.f32 %v1531, %v1619
      %1621 = vmatmul.bf16.gmra.mxu0 %v629
      %v1622 = vpop.f32.mrf.mxu0
      %v1623 = vadd.f32 %v1534, %v1622
      %v1624 = vpop.f32.mrf.mxu0
      %v1625 = vadd.f32 %v1536, %v1624
      %1626 = vmatmul.bf16.gmra.mxu0 %v633
      %v1627 = vpop.f32.mrf.mxu0
      %v1628 = vadd.f32 %v1539, %v1627
      %v1629 = vpop.f32.mrf.mxu0
      %v1630 = vadd.f32 %v1541, %v1629
      %1631 = vmatmul.bf16.gmra.mxu0 %v637
      %v1632 = vpop.f32.mrf.mxu0
      %v1633 = vadd.f32 %v1544, %v1632
      %v1634 = vpop.f32.mrf.mxu0
      %v1635 = vadd.f32 %v1546, %v1634
      %1636 = vmatmul.bf16.gmra.mxu0 %v641
      %v1637 = vpop.f32.mrf.mxu0
      %v1638 = vadd.f32 %v1549, %v1637
      %v1639 = vpop.f32.mrf.mxu0
      %v1640 = vadd.f32 %v1551, %v1639
      %1641 = vmatmul.bf16.gmra.mxu0 %v645
      %v1642 = vpop.f32.mrf.mxu0
      %v1643 = vadd.f32 %v1554, %v1642
      %v1644 = vpop.f32.mrf.mxu0
      %v1645 = vadd.f32 %v1556, %v1644
      %1646 = vmatmul.bf16.gmra.mxu0 %v649
      %v1647 = vpop.f32.mrf.mxu0
      %v1648 = vadd.f32 %v1559, %v1647
      %v1649 = vpop.f32.mrf.mxu0
      %v1650 = vadd.f32 %v1561, %v1649
      %1651 = vmatmul.bf16.gmra.mxu0 %v653
      %v1652 = vpop.f32.mrf.mxu0
      %v1653 = vadd.f32 %v1564, %v1652
      %v1654 = vpop.f32.mrf.mxu0
      %v1655 = vadd.f32 %v1566, %v1654
      %1656 = vmatmul.bf16.gmra.mxu0 %v657
      %v1657 = vpop.f32.mrf.mxu0
      %v1658 = vadd.f32 %v1569, %v1657
      %v1659 = vpop.f32.mrf.mxu0
      %v1660 = vadd.f32 %v1571, %v1659
      %1661 = vmatmul.bf16.gmra.mxu0 %v661
      %v1662 = vpop.f32.mrf.mxu0
      %v1663 = vadd.f32 %v1574, %v1662
      %v1664 = vpop.f32.mrf.mxu0
      %v1665 = vadd.f32 %v1576, %v1664
      %1666 = vmatmul.bf16.gmra.mxu0 %v665
      %v1667 = vpop.f32.mrf.mxu0
      %v1668 = vadd.f32 %v1579, %v1667
      %v1669 = vpop.f32.mrf.mxu0
      %v1670 = vadd.f32 %v1581, %v1669
      %1671 = vmatmul.bf16.gmra.mxu0 %v669
      %v1672 = vpop.f32.mrf.mxu0
      %v1673 = vadd.f32 %v1584, %v1672
      %v1674 = vpop.f32.mrf.mxu0
      %v1675 = vadd.f32 %v1586, %v1674
      %1676 = vmatmul.bf16.gmra.mxu0 %v673
      %v1677 = vpop.f32.mrf.mxu0
      %v1678 = vadd.f32 %v1589, %v1677
      %v1679 = vpop.f32.mrf.mxu0
      %v1680 = vadd.f32 %v1591, %v1679
      %1681 = vdwg.mxu0
      %1682 = vmatpush.bf16.msra.mxu0 %v994
      %1683 = vmatpush.bf16.msra.mxu0 %v992
      %1684 = vmatpush.bf16.msra.mxu0 %v990
      %1685 = vmatpush.bf16.msra.mxu0 %v988
      %1686 = vmatpush.bf16.msra.mxu0 %v986
      %1687 = vmatpush.bf16.msra.mxu0 %v984
      %1688 = vmatpush.bf16.msra.mxu0 %v982
      %1689 = vmatpush.bf16.msra.mxu0 %v980
      %1690 = vmatmul.bf16.gmra.mxu0 %v614
      %v1691 = vpop.f32.mrf.mxu0
      %v1692 = vadd.f32 %v1603, %v1691
      %v1693 = vpop.f32.mrf.mxu0
      %v1694 = vadd.f32 %v1605, %v1693
      %1695 = vmatmul.bf16.gmra.mxu0 %v618
      %v1696 = vpop.f32.mrf.mxu0
      %v1697 = vadd.f32 %v1608, %v1696
      %v1698 = vpop.f32.mrf.mxu0
      %v1699 = vadd.f32 %v1610, %v1698
      %1700 = vmatmul.bf16.gmra.mxu0 %v622
      %v1701 = vpop.f32.mrf.mxu0
      %v1702 = vadd.f32 %v1613, %v1701
      %v1703 = vpop.f32.mrf.mxu0
      %v1704 = vadd.f32 %v1615, %v1703
      %1705 = vmatmul.bf16.gmra.mxu0 %v626
      %v1706 = vpop.f32.mrf.mxu0
      %v1707 = vadd.f32 %v1618, %v1706
      %v1708 = vpop.f32.mrf.mxu0
      %v1709 = vadd.f32 %v1620, %v1708
      %1710 = vmatmul.bf16.gmra.mxu0 %v630
      %v1711 = vpop.f32.mrf.mxu0
      %v1712 = vadd.f32 %v1623, %v1711
      %v1713 = vpop.f32.mrf.mxu0
      %v1714 = vadd.f32 %v1625, %v1713
      %1715 = vmatmul.bf16.gmra.mxu0 %v634
      %v1716 = vpop.f32.mrf.mxu0
      %v1717 = vadd.f32 %v1628, %v1716
      %v1718 = vpop.f32.mrf.mxu0
      %v1719 = vadd.f32 %v1630, %v1718
      %1720 = vmatmul.bf16.gmra.mxu0 %v638
      %v1721 = vpop.f32.mrf.mxu0
      %v1722 = vadd.f32 %v1633, %v1721
      %v1723 = vpop.f32.mrf.mxu0
      %v1724 = vadd.f32 %v1635, %v1723
      %1725 = vmatmul.bf16.gmra.mxu0 %v642
      %v1726 = vpop.f32.mrf.mxu0
      %v1727 = vadd.f32 %v1638, %v1726
      %v1728 = vpop.f32.mrf.mxu0
      %v1729 = vadd.f32 %v1640, %v1728
      %1730 = vmatmul.bf16.gmra.mxu0 %v646
      %v1731 = vpop.f32.mrf.mxu0
      %v1732 = vadd.f32 %v1643, %v1731
      %v1733 = vpop.f32.mrf.mxu0
      %v1734 = vadd.f32 %v1645, %v1733
      %1735 = vmatmul.bf16.gmra.mxu0 %v650
      %v1736 = vpop.f32.mrf.mxu0
      %v1737 = vadd.f32 %v1648, %v1736
      %v1738 = vpop.f32.mrf.mxu0
      %v1739 = vadd.f32 %v1650, %v1738
      %1740 = vmatmul.bf16.gmra.mxu0 %v654
      %v1741 = vpop.f32.mrf.mxu0
      %v1742 = vadd.f32 %v1653, %v1741
      %v1743 = vpop.f32.mrf.mxu0
      %v1744 = vadd.f32 %v1655, %v1743
      %1745 = vmatmul.bf16.gmra.mxu0 %v658
      %v1746 = vpop.f32.mrf.mxu0
      %v1747 = vadd.f32 %v1658, %v1746
      %v1748 = vpop.f32.mrf.mxu0
      %v1749 = vadd.f32 %v1660, %v1748
      %1750 = vmatmul.bf16.gmra.mxu0 %v662
      %v1751 = vpop.f32.mrf.mxu0
      %v1752 = vadd.f32 %v1663, %v1751
      %v1753 = vpop.f32.mrf.mxu0
      %v1754 = vadd.f32 %v1665, %v1753
      %1755 = vmatmul.bf16.gmra.mxu0 %v666
      %v1756 = vpop.f32.mrf.mxu0
      %v1757 = vadd.f32 %v1668, %v1756
      %v1758 = vpop.f32.mrf.mxu0
      %v1759 = vadd.f32 %v1670, %v1758
      %1760 = vmatmul.bf16.gmra.mxu0 %v670
      %v1761 = vpop.f32.mrf.mxu0
      %v1762 = vadd.f32 %v1673, %v1761
      %v1763 = vpop.f32.mrf.mxu0
      %v1764 = vadd.f32 %v1675, %v1763
      %1765 = vmatmul.bf16.gmra.mxu0 %v674
      %v1766 = vpop.f32.mrf.mxu0
      %v1767 = vadd.f32 %v1678, %v1766
      %v1768 = vpop.f32.mrf.mxu0
      %v1769 = vadd.f32 %v1680, %v1768
      %1770 = vdwg.mxu0
      %v1771 = vmax.f32 %v1336, 0.0
      %v1772 = vmax.f32 %v1692, 0.0
      %v1773 = vmax.f32 %v1338, 0.0
      %v1774 = vmax.f32 %v1694, 0.0
      %v1775 = vmax.f32 %v1341, 0.0
      %v1776 = vmax.f32 %v1697, 0.0
      %v1777 = vmax.f32 %v1343, 0.0
      %v1778 = vmax.f32 %v1699, 0.0
      %v1779 = vmax.f32 %v1346, 0.0
      %v1780 = vmax.f32 %v1702, 0.0
      %v1781 = vmax.f32 %v1348, 0.0
      %v1782 = vmax.f32 %v1704, 0.0
      %v1783 = vmax.f32 %v1351, 0.0
      %v1784 = vmax.f32 %v1707, 0.0
      %v1785 = vmax.f32 %v1353, 0.0
      %v1786 = vmax.f32 %v1709, 0.0
      %v1787 = vmax.f32 %v1356, 0.0
      %v1788 = vmax.f32 %v1712, 0.0
      %v1789 = vmax.f32 %v1358, 0.0
      %v1790 = vmax.f32 %v1714, 0.0
      %v1791 = vmax.f32 %v1361, 0.0
      %v1792 = vmax.f32 %v1717, 0.0
      %v1793 = vmax.f32 %v1363, 0.0
      %v1794 = vmax.f32 %v1719, 0.0
      %v1795 = vmax.f32 %v1366, 0.0
      %v1796 = vmax.f32 %v1722, 0.0
      %v1797 = vmax.f32 %v1368, 0.0
      %v1798 = vmax.f32 %v1724, 0.0
      %v1799 = vmax.f32 %v1371, 0.0
      %v1800 = vmax.f32 %v1727, 0.0
      %v1801 = vmax.f32 %v1373, 0.0
      %v1802 = vmax.f32 %v1729, 0.0
      %v1803 = vmax.f32 %v1376, 0.0
      %v1804 = vmax.f32 %v1732, 0.0
      %v1805 = vmax.f32 %v1378, 0.0
      %v1806 = vmax.f32 %v1734, 0.0
      %v1807 = vmax.f32 %v1381, 0.0
      %v1808 = vmax.f32 %v1737, 0.0
      %v1809 = vmax.f32 %v1383, 0.0
      %v1810 = vmax.f32 %v1739, 0.0
      %v1811 = vmax.f32 %v1386, 0.0
      %v1812 = vmax.f32 %v1742, 0.0
      %v1813 = vmax.f32 %v1388, 0.0
      %v1814 = vmax.f32 %v1744, 0.0
      %v1815 = vmax.f32 %v1391, 0.0
      %v1816 = vmax.f32 %v1747, 0.0
      %v1817 = vmax.f32 %v1393, 0.0
      %v1818 = vmax.f32 %v1749, 0.0
      %v1819 = vmax.f32 %v1396, 0.0
      %v1820 = vmax.f32 %v1752, 0.0
      %v1821 = vmax.f32 %v1398, 0.0
      %v1822 = vmax.f32 %v1754, 0.0
      %v1823 = vmax.f32 %v1401, 0.0
      %v1824 = vmax.f32 %v1757, 0.0
      %v1825 = vmax.f32 %v1403, 0.0
      %v1826 = vmax.f32 %v1759, 0.0
      %v1827 = vmax.f32 %v1406, 0.0
      %v1828 = vmax.f32 %v1762, 0.0
      %v1829 = vmax.f32 %v1408, 0.0
      %v1830 = vmax.f32 %v1764, 0.0
      %v1831 = vmax.f32 %v1411, 0.0
      %v1832 = vmax.f32 %v1767, 0.0
      %v1833 = vmax.f32 %v1413, 0.0
      %v1834 = vmax.f32 %v1769, 0.0
      %v1835 = vpack.c.bf16 %v1773, %v1771
      %v1836 = vpack.c.bf16 %v1774, %v1772
      %v1837 = vpack.c.bf16 %v1777, %v1775
      %v1838 = vpack.c.bf16 %v1778, %v1776
      %v1839 = vpack.c.bf16 %v1781, %v1779
      %v1840 = vpack.c.bf16 %v1782, %v1780
      %v1841 = vpack.c.bf16 %v1785, %v1783
      %v1842 = vpack.c.bf16 %v1786, %v1784
      %v1843 = vpack.c.bf16 %v1789, %v1787
      %v1844 = vpack.c.bf16 %v1790, %v1788
      %v1845 = vpack.c.bf16 %v1793, %v1791
      %v1846 = vpack.c.bf16 %v1794, %v1792
      %v1847 = vpack.c.bf16 %v1797, %v1795
      %v1848 = vpack.c.bf16 %v1798, %v1796
      %v1849 = vpack.c.bf16 %v1801, %v1799
      %v1850 = vpack.c.bf16 %v1802, %v1800
      %v1851 = vpack.c.bf16 %v1805, %v1803
      %v1852 = vpack.c.bf16 %v1806, %v1804
      %v1853 = vpack.c.bf16 %v1809, %v1807
      %v1854 = vpack.c.bf16 %v1810, %v1808
      %v1855 = vpack.c.bf16 %v1813, %v1811
      %v1856 = vpack.c.bf16 %v1814, %v1812
      %v1857 = vpack.c.bf16 %v1817, %v1815
      %v1858 = vpack.c.bf16 %v1818, %v1816
      %v1859 = vpack.c.bf16 %v1821, %v1819
      %v1860 = vpack.c.bf16 %v1822, %v1820
      %v1861 = vpack.c.bf16 %v1825, %v1823
      %v1862 = vpack.c.bf16 %v1826, %v1824
      %v1863 = vpack.c.bf16 %v1829, %v1827
      %v1864 = vpack.c.bf16 %v1830, %v1828
      %v1865 = vpack.c.bf16 %v1833, %v1831
      %v1866 = vpack.c.bf16 %v1834, %v1832
      %v1867 = vld [vmem:[%s3] sm:$0xf]
      %v1868 = vld [vmem:[%s3 + $0x4] sm:$0xf]
      %v1869 = vld [vmem:[%s3 + $0x8] sm:$0xf]
      %v1870 = vld [vmem:[%s3 + $0xc] sm:$0xf]
      %v1871 = vld [vmem:[%s3 + $0x10] sm:$0xf]
      %v1872 = vld [vmem:[%s3 + $0x14] sm:$0xf]
      %v1873 = vld [vmem:[%s3 + $0x18] sm:$0xf]
      %v1874 = vld [vmem:[%s3 + $0x1c] sm:$0xf]
      %v1875 = vld [vmem:[%s3 + $0x20] sm:$0xf]
      %v1876 = vld [vmem:[%s3 + $0x24] sm:$0xf]
      %v1877 = vld [vmem:[%s3 + $0x28] sm:$0xf]
      %v1878 = vld [vmem:[%s3 + $0x2c] sm:$0xf]
      %v1879 = vld [vmem:[%s3 + $0x30] sm:$0xf]
      %v1880 = vld [vmem:[%s3 + $0x34] sm:$0xf]
      %v1881 = vld [vmem:[%s3 + $0x38] sm:$0xf]
      %v1882 = vld [vmem:[%s3 + $0x3c] sm:$0xf]
      %v1883 = vld [vmem:[%s3 + $0x40] sm:$0xf]
      %v1884 = vld [vmem:[%s3 + $0x44] sm:$0xf]
      %v1885 = vld [vmem:[%s3 + $0x48] sm:$0xf]
      %v1886 = vld [vmem:[%s3 + $0x4c] sm:$0xf]
      %v1887 = vld [vmem:[%s3 + $0x50] sm:$0xf]
      %v1888 = vld [vmem:[%s3 + $0x54] sm:$0xf]
      %v1889 = vld [vmem:[%s3 + $0x58] sm:$0xf]
      %v1890 = vld [vmem:[%s3 + $0x5c] sm:$0xf]
      %v1891 = vld [vmem:[%s3 + $0x60] sm:$0xf]
      %v1892 = vld [vmem:[%s3 + $0x64] sm:$0xf]
      %v1893 = vld [vmem:[%s3 + $0x68] sm:$0xf]
      %v1894 = vld [vmem:[%s3 + $0x6c] sm:$0xf]
      %v1895 = vld [vmem:[%s3 + $0x70] sm:$0xf]
      %v1896 = vld [vmem:[%s3 + $0x74] sm:$0xf]
      %v1897 = vld [vmem:[%s3 + $0x78] sm:$0xf]
      %v1898 = vld [vmem:[%s3 + $0x7c] sm:$0xf]
      %v1899 = vld [vmem:[%s4] sm:$0x1]
      %v1901 = vperm.slane %v1899, 0
      %v1935 = vunpack.c.l.b16 %v1867
      %v1936 = vunpack.c.l.b16 %v1868
      %v1937 = vunpack.c.l.b16 %v1869
      %v1938 = vunpack.c.l.b16 %v1870
      %v1939 = vunpack.c.l.b16 %v1871
      %v1940 = vunpack.c.l.b16 %v1872
      %v1941 = vunpack.c.l.b16 %v1873
      %v1942 = vunpack.c.l.b16 %v1874
      %v1943 = vunpack.c.l.b16 %v1875
      %v1944 = vunpack.c.l.b16 %v1876
      %v1945 = vunpack.c.l.b16 %v1877
      %v1946 = vunpack.c.l.b16 %v1878
      %v1947 = vunpack.c.l.b16 %v1879
      %v1948 = vunpack.c.l.b16 %v1880
      %v1949 = vunpack.c.l.b16 %v1881
      %v1950 = vunpack.c.l.b16 %v1882
      %v1951 = vunpack.c.l.b16 %v1883
      %v1952 = vunpack.c.l.b16 %v1884
      %v1953 = vunpack.c.l.b16 %v1885
      %v1954 = vunpack.c.l.b16 %v1886
      %v1955 = vunpack.c.l.b16 %v1887
      %v1956 = vunpack.c.l.b16 %v1888
      %v1957 = vunpack.c.l.b16 %v1889
      %v1958 = vunpack.c.l.b16 %v1890
      %v1959 = vunpack.c.l.b16 %v1891
      %v1960 = vunpack.c.l.b16 %v1892
      %v1961 = vunpack.c.l.b16 %v1893
      %v1962 = vunpack.c.l.b16 %v1894
      %v1963 = vunpack.c.l.b16 %v1895
      %v1964 = vunpack.c.l.b16 %v1896
      %v1965 = vunpack.c.l.b16 %v1897
      %v1966 = vunpack.c.l.b16 %v1898
      %v1967 = vpack.c.b16 %v1936, %v1935
      %v1968 = vpack.c.b16 %v1938, %v1937
      %v1969 = vpack.c.b16 %v1940, %v1939
      %v1970 = vpack.c.b16 %v1942, %v1941
      %v1971 = vpack.c.b16 %v1944, %v1943
      %v1972 = vpack.c.b16 %v1946, %v1945
      %v1973 = vpack.c.b16 %v1948, %v1947
      %v1974 = vpack.c.b16 %v1950, %v1949
      %v1975 = vpack.c.b16 %v1952, %v1951
      %v1976 = vpack.c.b16 %v1954, %v1953
      %v1977 = vpack.c.b16 %v1956, %v1955
      %v1978 = vpack.c.b16 %v1958, %v1957
      %v1979 = vpack.c.b16 %v1960, %v1959
      %v1980 = vpack.c.b16 %v1962, %v1961
      %v1981 = vpack.c.b16 %v1964, %v1963
      %v1982 = vpack.c.b16 %v1966, %v1965
      %1999 = vmatpush.bf16.msra.mxu0 %v1974
      %2000 = vmatpush.bf16.msra.mxu0 %v1973
      %2001 = vmatpush.bf16.msra.mxu0 %v1972
      %2002 = vmatpush.bf16.msra.mxu0 %v1971
      %2003 = vmatpush.bf16.msra.mxu0 %v1970
      %2004 = vmatpush.bf16.msra.mxu0 %v1969
      %2005 = vmatpush.bf16.msra.mxu0 %v1968
      %2006 = vmatpush.bf16.msra.mxu0 %v1967
      %2007 = vmatmul.bf16.gmra.mxu0 %v1835
      %v2008 = vpop.f32.mrf.mxu0
      %v2009 = vadd.f32 %v1901, %v2008
      %v2010 = vpop.f32.mrf.mxu0
      %v2011 = vadd.f32 %v1901, %v2010
      %2012 = vmatmul.bf16.gmra.mxu0 %v1837
      %v2013 = vpop.f32.mrf.mxu0
      %v2014 = vadd.f32 %v1901, %v2013
      %v2015 = vpop.f32.mrf.mxu0
      %v2016 = vadd.f32 %v1901, %v2015
      %2017 = vmatmul.bf16.gmra.mxu0 %v1839
      %v2018 = vpop.f32.mrf.mxu0
      %v2019 = vadd.f32 %v1901, %v2018
      %v2020 = vpop.f32.mrf.mxu0
      %v2021 = vadd.f32 %v1901, %v2020
      %2022 = vmatmul.bf16.gmra.mxu0 %v1841
      %v2023 = vpop.f32.mrf.mxu0
      %v2024 = vadd.f32 %v1901, %v2023
      %v2025 = vpop.f32.mrf.mxu0
      %v2026 = vadd.f32 %v1901, %v2025
      %2027 = vmatmul.bf16.gmra.mxu0 %v1843
      %v2028 = vpop.f32.mrf.mxu0
      %v2029 = vadd.f32 %v1901, %v2028
      %v2030 = vpop.f32.mrf.mxu0
      %v2031 = vadd.f32 %v1901, %v2030
      %2032 = vmatmul.bf16.gmra.mxu0 %v1845
      %v2033 = vpop.f32.mrf.mxu0
      %v2034 = vadd.f32 %v1901, %v2033
      %v2035 = vpop.f32.mrf.mxu0
      %v2036 = vadd.f32 %v1901, %v2035
      %2037 = vmatmul.bf16.gmra.mxu0 %v1847
      %v2038 = vpop.f32.mrf.mxu0
      %v2039 = vadd.f32 %v1901, %v2038
      %v2040 = vpop.f32.mrf.mxu0
      %v2041 = vadd.f32 %v1901, %v2040
      %2042 = vmatmul.bf16.gmra.mxu0 %v1849
      %v2043 = vpop.f32.mrf.mxu0
      %v2044 = vadd.f32 %v1901, %v2043
      %v2045 = vpop.f32.mrf.mxu0
      %v2046 = vadd.f32 %v1901, %v2045
      %2047 = vmatmul.bf16.gmra.mxu0 %v1851
      %v2048 = vpop.f32.mrf.mxu0
      %v2049 = vadd.f32 %v1901, %v2048
      %v2050 = vpop.f32.mrf.mxu0
      %v2051 = vadd.f32 %v1901, %v2050
      %2052 = vmatmul.bf16.gmra.mxu0 %v1853
      %v2053 = vpop.f32.mrf.mxu0
      %v2054 = vadd.f32 %v1901, %v2053
      %v2055 = vpop.f32.mrf.mxu0
      %v2056 = vadd.f32 %v1901, %v2055
      %2057 = vmatmul.bf16.gmra.mxu0 %v1855
      %v2058 = vpop.f32.mrf.mxu0
      %v2059 = vadd.f32 %v1901, %v2058
      %v2060 = vpop.f32.mrf.mxu0
      %v2061 = vadd.f32 %v1901, %v2060
      %2062 = vmatmul.bf16.gmra.mxu0 %v1857
      %v2063 = vpop.f32.mrf.mxu0
      %v2064 = vadd.f32 %v1901, %v2063
      %v2065 = vpop.f32.mrf.mxu0
      %v2066 = vadd.f32 %v1901, %v2065
      %2067 = vmatmul.bf16.gmra.mxu0 %v1859
      %v2068 = vpop.f32.mrf.mxu0
      %v2069 = vadd.f32 %v1901, %v2068
      %v2070 = vpop.f32.mrf.mxu0
      %v2071 = vadd.f32 %v1901, %v2070
      %2072 = vmatmul.bf16.gmra.mxu0 %v1861
      %v2073 = vpop.f32.mrf.mxu0
      %v2074 = vadd.f32 %v1901, %v2073
      %v2075 = vpop.f32.mrf.mxu0
      %v2076 = vadd.f32 %v1901, %v2075
      %2077 = vmatmul.bf16.gmra.mxu0 %v1863
      %v2078 = vpop.f32.mrf.mxu0
      %v2079 = vadd.f32 %v1901, %v2078
      %v2080 = vpop.f32.mrf.mxu0
      %v2081 = vadd.f32 %v1901, %v2080
      %2082 = vmatmul.bf16.gmra.mxu0 %v1865
      %v2083 = vpop.f32.mrf.mxu0
      %v2084 = vadd.f32 %v1901, %v2083
      %v2085 = vpop.f32.mrf.mxu0
      %v2086 = vadd.f32 %v1901, %v2085
      %2087 = vdwg.mxu0
      %2088 = vmatpush.bf16.msra.mxu0 %v1982
      %2089 = vmatpush.bf16.msra.mxu0 %v1981
      %2090 = vmatpush.bf16.msra.mxu0 %v1980
      %2091 = vmatpush.bf16.msra.mxu0 %v1979
      %2092 = vmatpush.bf16.msra.mxu0 %v1978
      %2093 = vmatpush.bf16.msra.mxu0 %v1977
      %2094 = vmatpush.bf16.msra.mxu0 %v1976
      %2095 = vmatpush.bf16.msra.mxu0 %v1975
      %2096 = vmatmul.bf16.gmra.mxu0 %v1836
      %v2097 = vpop.f32.mrf.mxu0
      %v2098 = vadd.f32 %v2009, %v2097
      %v2099 = vpop.f32.mrf.mxu0
      %v2100 = vadd.f32 %v2011, %v2099
      %2101 = vmatmul.bf16.gmra.mxu0 %v1838
      %v2102 = vpop.f32.mrf.mxu0
      %v2103 = vadd.f32 %v2014, %v2102
      %v2104 = vpop.f32.mrf.mxu0
      %v2105 = vadd.f32 %v2016, %v2104
      %2106 = vmatmul.bf16.gmra.mxu0 %v1840
      %v2107 = vpop.f32.mrf.mxu0
      %v2108 = vadd.f32 %v2019, %v2107
      %v2109 = vpop.f32.mrf.mxu0
      %v2110 = vadd.f32 %v2021, %v2109
      %2111 = vmatmul.bf16.gmra.mxu0 %v1842
      %v2112 = vpop.f32.mrf.mxu0
      %v2113 = vadd.f32 %v2024, %v2112
      %v2114 = vpop.f32.mrf.mxu0
      %v2115 = vadd.f32 %v2026, %v2114
      %2116 = vmatmul.bf16.gmra.mxu0 %v1844
      %v2117 = vpop.f32.mrf.mxu0
      %v2118 = vadd.f32 %v2029, %v2117
      %v2119 = vpop.f32.mrf.mxu0
      %v2120 = vadd.f32 %v2031, %v2119
      %2121 = vmatmul.bf16.gmra.mxu0 %v1846
      %v2122 = vpop.f32.mrf.mxu0
      %v2123 = vadd.f32 %v2034, %v2122
      %v2124 = vpop.f32.mrf.mxu0
      %v2125 = vadd.f32 %v2036, %v2124
      %2126 = vmatmul.bf16.gmra.mxu0 %v1848
      %v2127 = vpop.f32.mrf.mxu0
      %v2128 = vadd.f32 %v2039, %v2127
      %v2129 = vpop.f32.mrf.mxu0
      %v2130 = vadd.f32 %v2041, %v2129
      %2131 = vmatmul.bf16.gmra.mxu0 %v1850
      %v2132 = vpop.f32.mrf.mxu0
      %v2133 = vadd.f32 %v2044, %v2132
      %v2134 = vpop.f32.mrf.mxu0
      %v2135 = vadd.f32 %v2046, %v2134
      %2136 = vmatmul.bf16.gmra.mxu0 %v1852
      %v2137 = vpop.f32.mrf.mxu0
      %v2138 = vadd.f32 %v2049, %v2137
      %v2139 = vpop.f32.mrf.mxu0
      %v2140 = vadd.f32 %v2051, %v2139
      %2141 = vmatmul.bf16.gmra.mxu0 %v1854
      %v2142 = vpop.f32.mrf.mxu0
      %v2143 = vadd.f32 %v2054, %v2142
      %v2144 = vpop.f32.mrf.mxu0
      %v2145 = vadd.f32 %v2056, %v2144
      %2146 = vmatmul.bf16.gmra.mxu0 %v1856
      %v2147 = vpop.f32.mrf.mxu0
      %v2148 = vadd.f32 %v2059, %v2147
      %v2149 = vpop.f32.mrf.mxu0
      %v2150 = vadd.f32 %v2061, %v2149
      %2151 = vmatmul.bf16.gmra.mxu0 %v1858
      %v2152 = vpop.f32.mrf.mxu0
      %v2153 = vadd.f32 %v2064, %v2152
      %v2154 = vpop.f32.mrf.mxu0
      %v2155 = vadd.f32 %v2066, %v2154
      %2156 = vmatmul.bf16.gmra.mxu0 %v1860
      %v2157 = vpop.f32.mrf.mxu0
      %v2158 = vadd.f32 %v2069, %v2157
      %v2159 = vpop.f32.mrf.mxu0
      %v2160 = vadd.f32 %v2071, %v2159
      %2161 = vmatmul.bf16.gmra.mxu0 %v1862
      %v2162 = vpop.f32.mrf.mxu0
      %v2163 = vadd.f32 %v2074, %v2162
      %v2164 = vpop.f32.mrf.mxu0
      %v2165 = vadd.f32 %v2076, %v2164
      %2166 = vmatmul.bf16.gmra.mxu0 %v1864
      %v2167 = vpop.f32.mrf.mxu0
      %v2168 = vadd.f32 %v2079, %v2167
      %v2169 = vpop.f32.mrf.mxu0
      %v2170 = vadd.f32 %v2081, %v2169
      %2171 = vmatmul.bf16.gmra.mxu0 %v1866
      %v2172 = vpop.f32.mrf.mxu0
      %v2173 = vadd.f32 %v2084, %v2172
      %v2174 = vpop.f32.mrf.mxu0
      %v2175 = vadd.f32 %v2086, %v2174
      %2176 = vdwg.mxu0
      %v2177 = vmax.f32 %v2098, 0.0
      %v2178 = vmax.f32 %v2100, 0.0
      %v2179 = vmax.f32 %v2103, 0.0
      %v2180 = vmax.f32 %v2105, 0.0
      %v2181 = vmax.f32 %v2108, 0.0
      %v2182 = vmax.f32 %v2110, 0.0
      %v2183 = vmax.f32 %v2113, 0.0
      %v2184 = vmax.f32 %v2115, 0.0
      %v2185 = vmax.f32 %v2118, 0.0
      %v2186 = vmax.f32 %v2120, 0.0
      %v2187 = vmax.f32 %v2123, 0.0
      %v2188 = vmax.f32 %v2125, 0.0
      %v2189 = vmax.f32 %v2128, 0.0
      %v2190 = vmax.f32 %v2130, 0.0
      %v2191 = vmax.f32 %v2133, 0.0
      %v2192 = vmax.f32 %v2135, 0.0
      %v2193 = vmax.f32 %v2138, 0.0
      %v2194 = vmax.f32 %v2140, 0.0
      %v2195 = vmax.f32 %v2143, 0.0
      %v2196 = vmax.f32 %v2145, 0.0
      %v2197 = vmax.f32 %v2148, 0.0
      %v2198 = vmax.f32 %v2150, 0.0
      %v2199 = vmax.f32 %v2153, 0.0
      %v2200 = vmax.f32 %v2155, 0.0
      %v2201 = vmax.f32 %v2158, 0.0
      %v2202 = vmax.f32 %v2160, 0.0
      %v2203 = vmax.f32 %v2163, 0.0
      %v2204 = vmax.f32 %v2165, 0.0
      %v2205 = vmax.f32 %v2168, 0.0
      %v2206 = vmax.f32 %v2170, 0.0
      %v2207 = vmax.f32 %v2173, 0.0
      %v2208 = vmax.f32 %v2175, 0.0
      %v2209 = vpack.c.bf16 %v2178, %v2177
      %v2210 = vpack.c.bf16 %v2180, %v2179
      %v2211 = vpack.c.bf16 %v2182, %v2181
      %v2212 = vpack.c.bf16 %v2184, %v2183
      %v2213 = vpack.c.bf16 %v2186, %v2185
      %v2214 = vpack.c.bf16 %v2188, %v2187
      %v2215 = vpack.c.bf16 %v2190, %v2189
      %v2216 = vpack.c.bf16 %v2192, %v2191
      %v2217 = vpack.c.bf16 %v2194, %v2193
      %v2218 = vpack.c.bf16 %v2196, %v2195
      %v2219 = vpack.c.bf16 %v2198, %v2197
      %v2220 = vpack.c.bf16 %v2200, %v2199
      %v2221 = vpack.c.bf16 %v2202, %v2201
      %v2222 = vpack.c.bf16 %v2204, %v2203
      %v2223 = vpack.c.bf16 %v2206, %v2205
      %v2224 = vpack.c.bf16 %v2208, %v2207
      %v2225 = vld [vmem:[%s5] sm:$0xf]
      %v2226 = vld [vmem:[%s5 + $0x4] sm:$0xf]
      %v2227 = vld [vmem:[%s5 + $0x8] sm:$0xf]
      %v2228 = vld [vmem:[%s5 + $0xc] sm:$0xf]
      %v2229 = vld [vmem:[%s5 + $0x10] sm:$0xf]
      %v2230 = vld [vmem:[%s5 + $0x14] sm:$0xf]
      %v2231 = vld [vmem:[%s5 + $0x18] sm:$0xf]
      %v2232 = vld [vmem:[%s5 + $0x1c] sm:$0xf]
      %v2233 = vld [vmem:[%s5 + $0x20] sm:$0xf]
      %v2234 = vld [vmem:[%s5 + $0x24] sm:$0xf]
      %v2235 = vld [vmem:[%s5 + $0x28] sm:$0xf]
      %v2236 = vld [vmem:[%s5 + $0x2c] sm:$0xf]
      %v2237 = vld [vmem:[%s5 + $0x30] sm:$0xf]
      %v2238 = vld [vmem:[%s5 + $0x34] sm:$0xf]
      %v2239 = vld [vmem:[%s5 + $0x38] sm:$0xf]
      %v2240 = vld [vmem:[%s5 + $0x3c] sm:$0xf]
      %v2241 = vld [vmem:[%s6] sm:$0x1]
      %v2243 = vperm.slane %v2241, 0
      %v2261 = vunpack.c.l.b16 %v2225
      %v2262 = vunpack.c.l.b16 %v2226
      %v2263 = vunpack.c.l.b16 %v2227
      %v2264 = vunpack.c.l.b16 %v2228
      %v2265 = vunpack.c.l.b16 %v2229
      %v2266 = vunpack.c.l.b16 %v2230
      %v2267 = vunpack.c.l.b16 %v2231
      %v2268 = vunpack.c.l.b16 %v2232
      %v2269 = vunpack.c.l.b16 %v2233
      %v2270 = vunpack.c.l.b16 %v2234
      %v2271 = vunpack.c.l.b16 %v2235
      %v2272 = vunpack.c.l.b16 %v2236
      %v2273 = vunpack.c.l.b16 %v2237
      %v2274 = vunpack.c.l.b16 %v2238
      %v2275 = vunpack.c.l.b16 %v2239
      %v2276 = vunpack.c.l.b16 %v2240
      %v2277 = vpack.c.b16 %v2262, %v2261
      %v2278 = vpack.c.b16 %v2264, %v2263
      %v2279 = vpack.c.b16 %v2266, %v2265
      %v2280 = vpack.c.b16 %v2268, %v2267
      %v2281 = vpack.c.b16 %v2270, %v2269
      %v2282 = vpack.c.b16 %v2272, %v2271
      %v2283 = vpack.c.b16 %v2274, %v2273
      %v2284 = vpack.c.b16 %v2276, %v2275
      %2293 = vmatpush.bf16.msra.mxu0 %v2284
      %2294 = vmatpush.bf16.msra.mxu0 %v2283
      %2295 = vmatpush.bf16.msra.mxu0 %v2282
      %2296 = vmatpush.bf16.msra.mxu0 %v2281
      %2297 = vmatpush.bf16.msra.mxu0 %v2280
      %2298 = vmatpush.bf16.msra.mxu0 %v2279
      %2299 = vmatpush.bf16.msra.mxu0 %v2278
      %2300 = vmatpush.bf16.msra.mxu0 %v2277
      %2301 = vmatmul.bf16.gmra.mxu0 %v2209
      %v2302 = vpop.f32.mrf.mxu0
      %v2303 = vadd.f32 %v2243, %v2302
      %v2304 = vpop.f32.mrf.mxu0
      %v2305 = vadd.f32 %v2243, %v2304
      %2306 = vmatmul.bf16.gmra.mxu0 %v2210
      %v2307 = vpop.f32.mrf.mxu0
      %v2308 = vadd.f32 %v2243, %v2307
      %v2309 = vpop.f32.mrf.mxu0
      %v2310 = vadd.f32 %v2243, %v2309
      %2311 = vmatmul.bf16.gmra.mxu0 %v2211
      %v2312 = vpop.f32.mrf.mxu0
      %v2313 = vadd.f32 %v2243, %v2312
      %v2314 = vpop.f32.mrf.mxu0
      %v2315 = vadd.f32 %v2243, %v2314
      %2316 = vmatmul.bf16.gmra.mxu0 %v2212
      %v2317 = vpop.f32.mrf.mxu0
      %v2318 = vadd.f32 %v2243, %v2317
      %v2319 = vpop.f32.mrf.mxu0
      %v2320 = vadd.f32 %v2243, %v2319
      %2321 = vmatmul.bf16.gmra.mxu0 %v2213
      %v2322 = vpop.f32.mrf.mxu0
      %v2323 = vadd.f32 %v2243, %v2322
      %v2324 = vpop.f32.mrf.mxu0
      %v2325 = vadd.f32 %v2243, %v2324
      %2326 = vmatmul.bf16.gmra.mxu0 %v2214
      %v2327 = vpop.f32.mrf.mxu0
      %v2328 = vadd.f32 %v2243, %v2327
      %v2329 = vpop.f32.mrf.mxu0
      %v2330 = vadd.f32 %v2243, %v2329
      %2331 = vmatmul.bf16.gmra.mxu0 %v2215
      %v2332 = vpop.f32.mrf.mxu0
      %v2333 = vadd.f32 %v2243, %v2332
      %v2334 = vpop.f32.mrf.mxu0
      %v2335 = vadd.f32 %v2243, %v2334
      %2336 = vmatmul.bf16.gmra.mxu0 %v2216
      %v2337 = vpop.f32.mrf.mxu0
      %v2338 = vadd.f32 %v2243, %v2337
      %v2339 = vpop.f32.mrf.mxu0
      %v2340 = vadd.f32 %v2243, %v2339
      %2341 = vmatmul.bf16.gmra.mxu0 %v2217
      %v2342 = vpop.f32.mrf.mxu0
      %v2343 = vadd.f32 %v2243, %v2342
      %v2344 = vpop.f32.mrf.mxu0
      %v2345 = vadd.f32 %v2243, %v2344
      %2346 = vmatmul.bf16.gmra.mxu0 %v2218
      %v2347 = vpop.f32.mrf.mxu0
      %v2348 = vadd.f32 %v2243, %v2347
      %v2349 = vpop.f32.mrf.mxu0
      %v2350 = vadd.f32 %v2243, %v2349
      %2351 = vmatmul.bf16.gmra.mxu0 %v2219
      %v2352 = vpop.f32.mrf.mxu0
      %v2353 = vadd.f32 %v2243, %v2352
      %v2354 = vpop.f32.mrf.mxu0
      %v2355 = vadd.f32 %v2243, %v2354
      %2356 = vmatmul.bf16.gmra.mxu0 %v2220
      %v2357 = vpop.f32.mrf.mxu0
      %v2358 = vadd.f32 %v2243, %v2357
      %v2359 = vpop.f32.mrf.mxu0
      %v2360 = vadd.f32 %v2243, %v2359
      %2361 = vmatmul.bf16.gmra.mxu0 %v2221
      %v2362 = vpop.f32.mrf.mxu0
      %v2363 = vadd.f32 %v2243, %v2362
      %v2364 = vpop.f32.mrf.mxu0
      %v2365 = vadd.f32 %v2243, %v2364
      %2366 = vmatmul.bf16.gmra.mxu0 %v2222
      %v2367 = vpop.f32.mrf.mxu0
      %v2368 = vadd.f32 %v2243, %v2367
      %v2369 = vpop.f32.mrf.mxu0
      %v2370 = vadd.f32 %v2243, %v2369
      %2371 = vmatmul.bf16.gmra.mxu0 %v2223
      %v2372 = vpop.f32.mrf.mxu0
      %v2373 = vadd.f32 %v2243, %v2372
      %v2374 = vpop.f32.mrf.mxu0
      %v2375 = vadd.f32 %v2243, %v2374
      %2376 = vmatmul.bf16.gmra.mxu0 %v2224
      %v2377 = vpop.f32.mrf.mxu0
      %v2378 = vadd.f32 %v2243, %v2377
      %v2379 = vpop.f32.mrf.mxu0
      %v2380 = vadd.f32 %v2243, %v2379
      %2381 = vdwg.mxu0
      %2382 = vmax.xlane.f32.xlu0 %v2303
      %v2383 = vpop.xlane.xlu0 %2382
      %2384 = vmax.xlane.f32.xlu0 %v2305
      %v2385 = vpop.xlane.xlu0 %2384
      %2386 = vmax.xlane.f32.xlu0 %v2308
      %v2387 = vpop.xlane.xlu0 %2386
      %2388 = vmax.xlane.f32.xlu0 %v2310
      %v2389 = vpop.xlane.xlu0 %2388
      %2390 = vmax.xlane.f32.xlu0 %v2313
      %v2391 = vpop.xlane.xlu0 %2390
      %2392 = vmax.xlane.f32.xlu0 %v2315
      %v2393 = vpop.xlane.xlu0 %2392
      %2394 = vmax.xlane.f32.xlu0 %v2318
      %v2395 = vpop.xlane.xlu0 %2394
      %2396 = vmax.xlane.f32.xlu0 %v2320
      %v2397 = vpop.xlane.xlu0 %2396
      %2398 = vmax.xlane.f32.xlu0 %v2323
      %v2399 = vpop.xlane.xlu0 %2398
      %2400 = vmax.xlane.f32.xlu0 %v2325
      %v2401 = vpop.xlane.xlu0 %2400
      %2402 = vmax.xlane.f32.xlu0 %v2328
      %v2403 = vpop.xlane.xlu0 %2402
      %2404 = vmax.xlane.f32.xlu0 %v2330
      %v2405 = vpop.xlane.xlu0 %2404
      %2406 = vmax.xlane.f32.xlu0 %v2333
      %v2407 = vpop.xlane.xlu0 %2406
      %2408 = vmax.xlane.f32.xlu0 %v2335
      %v2409 = vpop.xlane.xlu0 %2408
      %2410 = vmax.xlane.f32.xlu0 %v2338
      %v2411 = vpop.xlane.xlu0 %2410
      %2412 = vmax.xlane.f32.xlu0 %v2340
      %v2413 = vpop.xlane.xlu0 %2412
      %2414 = vmax.xlane.f32.xlu0 %v2343
      %v2415 = vpop.xlane.xlu0 %2414
      %2416 = vmax.xlane.f32.xlu0 %v2345
      %v2417 = vpop.xlane.xlu0 %2416
      %2418 = vmax.xlane.f32.xlu0 %v2348
      %v2419 = vpop.xlane.xlu0 %2418
      %2420 = vmax.xlane.f32.xlu0 %v2350
      %v2421 = vpop.xlane.xlu0 %2420
      %2422 = vmax.xlane.f32.xlu0 %v2353
      %v2423 = vpop.xlane.xlu0 %2422
      %2424 = vmax.xlane.f32.xlu0 %v2355
      %v2425 = vpop.xlane.xlu0 %2424
      %2426 = vmax.xlane.f32.xlu0 %v2358
      %v2427 = vpop.xlane.xlu0 %2426
      %2428 = vmax.xlane.f32.xlu0 %v2360
      %v2429 = vpop.xlane.xlu0 %2428
      %2430 = vmax.xlane.f32.xlu0 %v2363
      %v2431 = vpop.xlane.xlu0 %2430
      %2432 = vmax.xlane.f32.xlu0 %v2365
      %v2433 = vpop.xlane.xlu0 %2432
      %2434 = vmax.xlane.f32.xlu0 %v2368
      %v2435 = vpop.xlane.xlu0 %2434
      %2436 = vmax.xlane.f32.xlu0 %v2370
      %v2437 = vpop.xlane.xlu0 %2436
      %2438 = vmax.xlane.f32.xlu0 %v2373
      %v2439 = vpop.xlane.xlu0 %2438
      %2440 = vmax.xlane.f32.xlu0 %v2375
      %v2441 = vpop.xlane.xlu0 %2440
      %2442 = vmax.xlane.f32.xlu0 %v2378
      %v2443 = vpop.xlane.xlu0 %2442
      %2444 = vmax.xlane.f32.xlu0 %v2380
      %v2445 = vpop.xlane.xlu0 %2444
      %v2446 = vsub.f32 %v2303, %v2383
      %v2447 = vsub.f32 %v2305, %v2385
      %v2448 = vsub.f32 %v2308, %v2387
      %v2449 = vsub.f32 %v2310, %v2389
      %v2450 = vsub.f32 %v2313, %v2391
      %v2451 = vsub.f32 %v2315, %v2393
      %v2452 = vsub.f32 %v2318, %v2395
      %v2453 = vsub.f32 %v2320, %v2397
      %v2454 = vsub.f32 %v2323, %v2399
      %v2455 = vsub.f32 %v2325, %v2401
      %v2456 = vsub.f32 %v2328, %v2403
      %v2457 = vsub.f32 %v2330, %v2405
      %v2458 = vsub.f32 %v2333, %v2407
      %v2459 = vsub.f32 %v2335, %v2409
      %v2460 = vsub.f32 %v2338, %v2411
      %v2461 = vsub.f32 %v2340, %v2413
      %v2462 = vsub.f32 %v2343, %v2415
      %v2463 = vsub.f32 %v2345, %v2417
      %v2464 = vsub.f32 %v2348, %v2419
      %v2465 = vsub.f32 %v2350, %v2421
      %v2466 = vsub.f32 %v2353, %v2423
      %v2467 = vsub.f32 %v2355, %v2425
      %v2468 = vsub.f32 %v2358, %v2427
      %v2469 = vsub.f32 %v2360, %v2429
      %v2470 = vsub.f32 %v2363, %v2431
      %v2471 = vsub.f32 %v2365, %v2433
      %v2472 = vsub.f32 %v2368, %v2435
      %v2473 = vsub.f32 %v2370, %v2437
      %v2474 = vsub.f32 %v2373, %v2439
      %v2475 = vsub.f32 %v2375, %v2441
      %v2476 = vsub.f32 %v2378, %v2443
      %v2477 = vsub.f32 %v2380, %v2445
      %v2478 = vmul.f32 %v2446, 1.442695
      %v2479 = vpow.pop %v2478
      %v2480 = vmul.f32 %v2447, 1.442695
      %v2481 = vpow.pop %v2480
      %v2482 = vmul.f32 %v2448, 1.442695
      %v2483 = vpow.pop %v2482
      %v2484 = vmul.f32 %v2449, 1.442695
      %v2485 = vpow.pop %v2484
      %v2486 = vmul.f32 %v2450, 1.442695
      %v2487 = vpow.pop %v2486
      %v2488 = vmul.f32 %v2451, 1.442695
      %v2489 = vpow.pop %v2488
      %v2490 = vmul.f32 %v2452, 1.442695
      %v2491 = vpow.pop %v2490
      %v2492 = vmul.f32 %v2453, 1.442695
      %v2493 = vpow.pop %v2492
      %v2494 = vmul.f32 %v2454, 1.442695
      %v2495 = vpow.pop %v2494
      %v2496 = vmul.f32 %v2455, 1.442695
      %v2497 = vpow.pop %v2496
      %v2498 = vmul.f32 %v2456, 1.442695
      %v2499 = vpow.pop %v2498
      %v2500 = vmul.f32 %v2457, 1.442695
      %v2501 = vpow.pop %v2500
      %v2502 = vmul.f32 %v2458, 1.442695
      %v2503 = vpow.pop %v2502
      %v2504 = vmul.f32 %v2459, 1.442695
      %v2505 = vpow.pop %v2504
      %v2506 = vmul.f32 %v2460, 1.442695
      %v2507 = vpow.pop %v2506
      %v2508 = vmul.f32 %v2461, 1.442695
      %v2509 = vpow.pop %v2508
      %v2510 = vmul.f32 %v2462, 1.442695
      %v2511 = vpow.pop %v2510
      %v2512 = vmul.f32 %v2463, 1.442695
      %v2513 = vpow.pop %v2512
      %v2514 = vmul.f32 %v2464, 1.442695
      %v2515 = vpow.pop %v2514
      %v2516 = vmul.f32 %v2465, 1.442695
      %v2517 = vpow.pop %v2516
      %v2518 = vmul.f32 %v2466, 1.442695
      %v2519 = vpow.pop %v2518
      %v2520 = vmul.f32 %v2467, 1.442695
      %v2521 = vpow.pop %v2520
      %v2522 = vmul.f32 %v2468, 1.442695
      %v2523 = vpow.pop %v2522
      %v2524 = vmul.f32 %v2469, 1.442695
      %v2525 = vpow.pop %v2524
      %v2526 = vmul.f32 %v2470, 1.442695
      %v2527 = vpow.pop %v2526
      %v2528 = vmul.f32 %v2471, 1.442695
      %v2529 = vpow.pop %v2528
      %v2530 = vmul.f32 %v2472, 1.442695
      %v2531 = vpow.pop %v2530
      %v2532 = vmul.f32 %v2473, 1.442695
      %v2533 = vpow.pop %v2532
      %v2534 = vmul.f32 %v2474, 1.442695
      %v2535 = vpow.pop %v2534
      %v2536 = vmul.f32 %v2475, 1.442695
      %v2537 = vpow.pop %v2536
      %v2538 = vmul.f32 %v2476, 1.442695
      %v2539 = vpow.pop %v2538
      %v2540 = vmul.f32 %v2477, 1.442695
      %v2541 = vpow.pop %v2540
      %2542 = vadd.xlane.f32.xlu0 %v2479
      %v2543 = vpop.xlane.xlu0 %2542
      %2544 = vadd.xlane.f32.xlu0 %v2481
      %v2545 = vpop.xlane.xlu0 %2544
      %2546 = vadd.xlane.f32.xlu0 %v2483
      %v2547 = vpop.xlane.xlu0 %2546
      %2548 = vadd.xlane.f32.xlu0 %v2485
      %v2549 = vpop.xlane.xlu0 %2548
      %2550 = vadd.xlane.f32.xlu0 %v2487
      %v2551 = vpop.xlane.xlu0 %2550
      %2552 = vadd.xlane.f32.xlu0 %v2489
      %v2553 = vpop.xlane.xlu0 %2552
      %2554 = vadd.xlane.f32.xlu0 %v2491
      %v2555 = vpop.xlane.xlu0 %2554
      %2556 = vadd.xlane.f32.xlu0 %v2493
      %v2557 = vpop.xlane.xlu0 %2556
      %2558 = vadd.xlane.f32.xlu0 %v2495
      %v2559 = vpop.xlane.xlu0 %2558
      %2560 = vadd.xlane.f32.xlu0 %v2497
      %v2561 = vpop.xlane.xlu0 %2560
      %2562 = vadd.xlane.f32.xlu0 %v2499
      %v2563 = vpop.xlane.xlu0 %2562
      %2564 = vadd.xlane.f32.xlu0 %v2501
      %v2565 = vpop.xlane.xlu0 %2564
      %2566 = vadd.xlane.f32.xlu0 %v2503
      %v2567 = vpop.xlane.xlu0 %2566
      %2568 = vadd.xlane.f32.xlu0 %v2505
      %v2569 = vpop.xlane.xlu0 %2568
      %2570 = vadd.xlane.f32.xlu0 %v2507
      %v2571 = vpop.xlane.xlu0 %2570
      %2572 = vadd.xlane.f32.xlu0 %v2509
      %v2573 = vpop.xlane.xlu0 %2572
      %2574 = vadd.xlane.f32.xlu0 %v2511
      %v2575 = vpop.xlane.xlu0 %2574
      %2576 = vadd.xlane.f32.xlu0 %v2513
      %v2577 = vpop.xlane.xlu0 %2576
      %2578 = vadd.xlane.f32.xlu0 %v2515
      %v2579 = vpop.xlane.xlu0 %2578
      %2580 = vadd.xlane.f32.xlu0 %v2517
      %v2581 = vpop.xlane.xlu0 %2580
      %2582 = vadd.xlane.f32.xlu0 %v2519
      %v2583 = vpop.xlane.xlu0 %2582
      %2584 = vadd.xlane.f32.xlu0 %v2521
      %v2585 = vpop.xlane.xlu0 %2584
      %2586 = vadd.xlane.f32.xlu0 %v2523
      %v2587 = vpop.xlane.xlu0 %2586
      %2588 = vadd.xlane.f32.xlu0 %v2525
      %v2589 = vpop.xlane.xlu0 %2588
      %2590 = vadd.xlane.f32.xlu0 %v2527
      %v2591 = vpop.xlane.xlu0 %2590
      %2592 = vadd.xlane.f32.xlu0 %v2529
      %v2593 = vpop.xlane.xlu0 %2592
      %2594 = vadd.xlane.f32.xlu0 %v2531
      %v2595 = vpop.xlane.xlu0 %2594
      %2596 = vadd.xlane.f32.xlu0 %v2533
      %v2597 = vpop.xlane.xlu0 %2596
      %2598 = vadd.xlane.f32.xlu0 %v2535
      %v2599 = vpop.xlane.xlu0 %2598
      %2600 = vadd.xlane.f32.xlu0 %v2537
      %v2601 = vpop.xlane.xlu0 %2600
      %2602 = vadd.xlane.f32.xlu0 %v2539
      %v2603 = vpop.xlane.xlu0 %2602
      %2604 = vadd.xlane.f32.xlu0 %v2541
      %v2605 = vpop.xlane.xlu0 %2604
      %v2606 = vrcp.pop %v2543
      %v2607 = vrcp.pop %v2545
      %v2608 = vrcp.pop %v2547
      %v2609 = vrcp.pop %v2549
      %v2610 = vrcp.pop %v2551
      %v2611 = vrcp.pop %v2553
      %v2612 = vrcp.pop %v2555
      %v2613 = vrcp.pop %v2557
      %v2614 = vrcp.pop %v2559
      %v2615 = vrcp.pop %v2561
      %v2616 = vrcp.pop %v2563
      %v2617 = vrcp.pop %v2565
      %v2618 = vrcp.pop %v2567
      %v2619 = vrcp.pop %v2569
      %v2620 = vrcp.pop %v2571
      %v2621 = vrcp.pop %v2573
      %v2622 = vrcp.pop %v2575
      %v2623 = vrcp.pop %v2577
      %v2624 = vrcp.pop %v2579
      %v2625 = vrcp.pop %v2581
      %v2626 = vrcp.pop %v2583
      %v2627 = vrcp.pop %v2585
      %v2628 = vrcp.pop %v2587
      %v2629 = vrcp.pop %v2589
      %v2630 = vrcp.pop %v2591
      %v2631 = vrcp.pop %v2593
      %v2632 = vrcp.pop %v2595
      %v2633 = vrcp.pop %v2597
      %v2634 = vrcp.pop %v2599
      %v2635 = vrcp.pop %v2601
      %v2636 = vrcp.pop %v2603
      %v2637 = vrcp.pop %v2605
      %v2638 = vmul.f32 %v2479, %v2606
      %v2639 = vmul.f32 %v2481, %v2607
      %v2640 = vmul.f32 %v2483, %v2608
      %v2641 = vmul.f32 %v2485, %v2609
      %v2642 = vmul.f32 %v2487, %v2610
      %v2643 = vmul.f32 %v2489, %v2611
      %v2644 = vmul.f32 %v2491, %v2612
      %v2645 = vmul.f32 %v2493, %v2613
      %v2646 = vmul.f32 %v2495, %v2614
      %v2647 = vmul.f32 %v2497, %v2615
      %v2648 = vmul.f32 %v2499, %v2616
      %v2649 = vmul.f32 %v2501, %v2617
      %v2650 = vmul.f32 %v2503, %v2618
      %v2651 = vmul.f32 %v2505, %v2619
      %v2652 = vmul.f32 %v2507, %v2620
      %v2653 = vmul.f32 %v2509, %v2621
      %v2654 = vmul.f32 %v2511, %v2622
      %v2655 = vmul.f32 %v2513, %v2623
      %v2656 = vmul.f32 %v2515, %v2624
      %v2657 = vmul.f32 %v2517, %v2625
      %v2658 = vmul.f32 %v2519, %v2626
      %v2659 = vmul.f32 %v2521, %v2627
      %v2660 = vmul.f32 %v2523, %v2628
      %v2661 = vmul.f32 %v2525, %v2629
      %v2662 = vmul.f32 %v2527, %v2630
      %v2663 = vmul.f32 %v2529, %v2631
      %v2664 = vmul.f32 %v2531, %v2632
      %v2665 = vmul.f32 %v2533, %v2633
      %v2666 = vmul.f32 %v2535, %v2634
      %v2667 = vmul.f32 %v2537, %v2635
      %v2668 = vmul.f32 %v2539, %v2636
      %v2669 = vmul.f32 %v2541, %v2637
      %2670 = vst [vmem:[%s283] sm:$0xff] %v2638
      %2671 = vst [vmem:[%s283 + $0x8] sm:$0xff] %v2639
      %2672 = vst [vmem:[%s283 + $0x10] sm:$0xff] %v2640
      %2673 = vst [vmem:[%s283 + $0x18] sm:$0xff] %v2641
      %2674 = vst [vmem:[%s283 + $0x20] sm:$0xff] %v2642
      %2675 = vst [vmem:[%s283 + $0x28] sm:$0xff] %v2643
      %2676 = vst [vmem:[%s283 + $0x30] sm:$0xff] %v2644
      %2677 = vst [vmem:[%s283 + $0x38] sm:$0xff] %v2645
      %2678 = vst [vmem:[%s283 + $0x40] sm:$0xff] %v2646
      %2679 = vst [vmem:[%s283 + $0x48] sm:$0xff] %v2647
      %2680 = vst [vmem:[%s283 + $0x50] sm:$0xff] %v2648
      %2681 = vst [vmem:[%s283 + $0x58] sm:$0xff] %v2649
      %2682 = vst [vmem:[%s283 + $0x60] sm:$0xff] %v2650
      %2683 = vst [vmem:[%s283 + $0x68] sm:$0xff] %v2651
      %2684 = vst [vmem:[%s283 + $0x70] sm:$0xff] %v2652
      %2685 = vst [vmem:[%s283 + $0x78] sm:$0xff] %v2653
      %2686 = vst [vmem:[%s283 + $0x80] sm:$0xff] %v2654
      %2687 = vst [vmem:[%s283 + $0x88] sm:$0xff] %v2655
      %2688 = vst [vmem:[%s283 + $0x90] sm:$0xff] %v2656
      %2689 = vst [vmem:[%s283 + $0x98] sm:$0xff] %v2657
      %2690 = vst [vmem:[%s283 + $0xa0] sm:$0xff] %v2658
      %2691 = vst [vmem:[%s283 + $0xa8] sm:$0xff] %v2659
      %2692 = vst [vmem:[%s283 + $0xb0] sm:$0xff] %v2660
      %2693 = vst [vmem:[%s283 + $0xb8] sm:$0xff] %v2661
      %2694 = vst [vmem:[%s283 + $0xc0] sm:$0xff] %v2662
      %2695 = vst [vmem:[%s283 + $0xc8] sm:$0xff] %v2663
      %2696 = vst [vmem:[%s283 + $0xd0] sm:$0xff] %v2664
      %2697 = vst [vmem:[%s283 + $0xd8] sm:$0xff] %v2665
      %2698 = vst [vmem:[%s283 + $0xe0] sm:$0xff] %v2666
      %2699 = vst [vmem:[%s283 + $0xe8] sm:$0xff] %v2667
      %2700 = vst [vmem:[%s283 + $0xf0] sm:$0xff] %v2668
      %2701 = vst [vmem:[%s283 + $0xf8] sm:$0xff] %v2669
      %s2702 = smul.u32 32, %s18
      %p2703 = scmp.lt.s32.totalorder %s2702, 63
      %s2704 = scalar_select %p2703, %s2702, 63
      %s2705 = smul.addr %s2704, 8
      %s2706 = scalar_lea.vmem %s7, %s2705
      // Predicated region
      $region49: #{latent_classifier.1} parent=47 // pred_check
        %p2707 = pneg %p188
      $region50: #{latent_classifier.1} parent=47 // pred_check_branch
        %2709 = sbr.rel (%p2707) target = $region52
      $region51: #{latent_classifier.1} parent=47 // pred_region
        %s2710 = smul.u32 32, %s18
      $region52: #{latent_classifier.1} parent=47 // pred_fallthru
        _
    $region48: #{latent_classifier.1} parent=5 // pred_fallthru
      _
    %p2711 = scmp.le.s32.totalorder 2, %s13
    // Predicated region
    $region53: #{latent_classifier.1} parent=5 // pred_check
      %p2712 = pneg %p2711
    $region54: #{latent_classifier.1} parent=5 // pred_check_branch
      %2714 = sbr.rel (%p2712) target = $region56
    $region55: #{latent_classifier.1} parent=5 // pred_region
      %s2715 = ssub.s32 %s13, 2
      // Predicated region
      $region57: #{latent_classifier.1} parent=55 // pred_check
        %p2716 = pneg %p194
      $region58: #{latent_classifier.1} parent=55 // pred_check_branch
        %2718 = sbr.rel (%p2716) target = $region60
      $region59: #{latent_classifier.1} parent=55 // pred_region
        %s2719 = smul.u32 32, %s19
        %p2720 = scmp.lt.s32.totalorder %s2719, 63
        %s2721 = scalar_select %p2720, %s2719, 63
        %s2722 = smul.addr %s2721, 8
        %s2723 = scalar_lea.vmem %s7, %s2722
      $region60: #{latent_classifier.1} parent=55 // pred_fallthru
        _
    $region56: #{latent_classifier.1} parent=5 // pred_fallthru
      _
  $region6: #{latent_classifier.1} parent=0 // loop_footer
    %s17 = sadd.s32 1, %s13
  $region7: #{latent_classifier.1} parent=0 // loop_footer_branch
    %12 = sbr.rel target = $region3
  $region8: #{latent_classifier.1} parent=0 // loop_exit
    _

</llo_original>
